<compile_context>
chip_gen: v7x
topology: tpu7x:2x2x1
jax: 0.10.0
libtpu: 0.0.40
codegen_flags: <defaults>
</compile_context>

<pallas_src>
import jax
import jax.numpy as jnp
from jax.experimental import pallas as pl
from jax.experimental.pallas import tpu as pltpu


def _discriminator_kernel(
    ch_ref,   # (TB, S, H) conflict last_hidden_state, bf16
    cm_ref,   # (TB, S)    conflict attention mask, f32
    sh_ref,   # (TB, S, H) solution last_hidden_state, bf16
    sm_ref,   # (TB, S)    solution mask (= solution_ids != 0), f32
    w1_ref,   # (3H, 512)  bf16
    b1_ref,   # (1, 512)   f32
    w2_ref,   # (512, 256) bf16
    b2_ref,   # (1, 256)   f32
    w3_ref,   # (256, 128) bf16 (lanes 4..127 zero-padded)
    b3_ref,   # (1, 128)   f32  (lanes 4..127 zero-padded)
    out_ref,  # (TB, 128)  f32  sigmoid scores in lanes 0..3
):
    ch = ch_ref[...].astype(jnp.float32)          # f32 pooling math (portable to v5e)
    sh = sh_ref[...].astype(jnp.float32)
    cm = cm_ref[...][:, :, None]                  # (TB, S, 1)
    sm = sm_ref[...][:, :, None]                  # (TB, S, 1)

    # Masked mean pooling over the sequence axis; divides go to the EUP slot.
    c_inv = pl.reciprocal(jnp.sum(cm, axis=1), approx=True)                    # (TB, 1)
    s_inv = pl.reciprocal(jnp.maximum(jnp.sum(sm, axis=1), 1.0), approx=True)  # clamp(min=1)
    conflict_rep = jnp.sum(ch * cm, axis=1) * c_inv                            # (TB, H)
    solution_rep = jnp.sum(sh * sm, axis=1) * s_inv                            # (TB, H)

    H = conflict_rep.shape[1]
    c_b = conflict_rep.astype(jnp.bfloat16)
    s_b = solution_rep.astype(jnp.bfloat16)
    p_b = (conflict_rep * solution_rep).astype(jnp.bfloat16)

    # combined_rep @ W1 as three static-Ref-sliced partial dots (f32 accumulation).
    h1 = (
        jnp.dot(c_b, w1_ref[0:H, :], preferred_element_type=jnp.float32)
        + jnp.dot(s_b, w1_ref[H:2 * H, :], preferred_element_type=jnp.float32)
        + jnp.dot(p_b, w1_ref[2 * H:3 * H, :], preferred_element_type=jnp.float32)
        + b1_ref[...]
    )
    h1 = jnp.maximum(h1, 0.0).astype(jnp.bfloat16)   # ReLU (Dropout = identity)

    h2 = jnp.dot(h1, w2_ref[...], preferred_element_type=jnp.float32) + b2_ref[...]
    h2 = jnp.maximum(h2, 0.0).astype(jnp.bfloat16)

    logits = jnp.dot(h2, w3_ref[...], preferred_element_type=jnp.float32) + b3_ref[...]

    # sigmoid = 1 / (1 + exp(-x)) via EUP exp + approx reciprocal (lane-dense store).
    out_ref[...] = pl.reciprocal(1.0 + jnp.exp(-logits), approx=True)


def merge_discriminator_forward(params, conflict_ids, solution_ids,
                                attention_mask=None, *, batch_tile=8):
    """Pallas-backed forward of MergeDiscriminator.

    Returns (weighted_score[B], detailed_scores[B, 4])."""
    emb = params["embedding"].astype(jnp.bfloat16)   # bf16 over HBM: half the traffic
    B, S = conflict_ids.shape
    H = emb.shape[1]

    if attention_mask is None:
        attention_mask = jnp.ones((B, S), jnp.float32)
    conflict_mask = attention_mask.astype(jnp.float32)
    solution_mask = (solution_ids != 0).astype(jnp.float32)

    # --- synthetic "encoder" (see TODO at top): hidden states stay bf16 ---
    conflict_hidden = emb[conflict_ids]              # (B, S, H) bf16
    solution_hidden = emb[solution_ids]              # (B, S, H) bf16

    # Pad batch to a multiple of the batch tile (pad conflict mask with ones so the
    # un-clamped conflict denominator never divides by zero in padded rows).
    TB = batch_tile
    B_pad = ((B + TB - 1) // TB) * TB
    pad = B_pad - B
    if pad:
        conflict_hidden = jnp.pad(conflict_hidden, ((0, pad), (0, 0), (0, 0)))
        solution_hidden = jnp.pad(solution_hidden, ((0, pad), (0, 0), (0, 0)))
        conflict_mask = jnp.pad(conflict_mask, ((0, pad), (0, 0)), constant_values=1.0)
        solution_mask = jnp.pad(solution_mask, ((0, pad), (0, 0)))

    # Weights: bf16 MXU operands (accumulation in f32 inside the kernel), f32 biases.
    NPAD = 128  # lane-dense output / padded final linear
    w1 = params["w1"].astype(jnp.bfloat16)                       # (3H, 512)
    b1 = params["b1"].astype(jnp.float32)                        # (1, 512)
    w2 = params["w2"].astype(jnp.bfloat16)                       # (512, 256)
    b2 = params["b2"].astype(jnp.float32)                        # (1, 256)
    w3 = (jnp.zeros((params["w3"].shape[0], NPAD), jnp.float32)
          .at[:, :4].set(params["w3"])).astype(jnp.bfloat16)     # (256, 128)
    b3 = jnp.zeros((1, NPAD), jnp.float32).at[:, :4].set(params["b3"])

    grid = (B_pad // TB,)

    out = pl.pallas_call(
        _discriminator_kernel,
        out_shape=jax.ShapeDtypeStruct((B_pad, NPAD), jnp.float32),
        grid_spec=pltpu.PrefetchScalarGridSpec(
            num_scalar_prefetch=0,
            grid=grid,
            in_specs=[
                pl.BlockSpec((TB, S, H), lambda b: (b, 0, 0)),   # conflict hidden
                pl.BlockSpec((TB, S), lambda b: (b, 0)),         # conflict mask
                pl.BlockSpec((TB, S, H), lambda b: (b, 0, 0)),   # solution hidden
                pl.BlockSpec((TB, S), lambda b: (b, 0)),         # solution mask
                pl.BlockSpec(w1.shape, lambda b: (0, 0)),        # weights: resident
                pl.BlockSpec(b1.shape, lambda b: (0, 0)),
                pl.BlockSpec(w2.shape, lambda b: (0, 0)),
                pl.BlockSpec(b2.shape, lambda b: (0, 0)),
                pl.BlockSpec(w3.shape, lambda b: (0, 0)),
                pl.BlockSpec(b3.shape, lambda b: (0, 0)),
            ],
            out_specs=pl.BlockSpec((TB, NPAD), lambda b: (b, 0)),
        ),
        compiler_params=pltpu.CompilerParams(
            dimension_semantics=("parallel",),       # shard batch across TensorCores
            vmem_limit_bytes=32 * 1024 * 1024,       # raise scoped VMEM limit
        ),
    )(conflict_hidden, conflict_mask, solution_hidden, solution_mask,
      w1, b1, w2, b2, w3, b3)

    detailed = out[:B, :4]                                           # sigmoid scores
    norm_w = jax.nn.softmax(params["dim_weights"].astype(jnp.float32))  # hoisted softmax
    weighted = jnp.sum(detailed * norm_w[None, :], axis=1)           # (B,)
    return weighted, detailed


def _reference_forward(params, conflict_ids, solution_ids, attention_mask):
    """Pure-JAX f32 reference of the same forward pass (for a sanity check)."""
    emb = params["embedding"]
    ch = emb[conflict_ids].astype(jnp.float32)
    sh = emb[solution_ids].astype(jnp.float32)
    cm = attention_mask.astype(jnp.float32)[:, :, None]
    sm = (solution_ids != 0).astype(jnp.float32)[:, :, None]
    crep = (ch * cm).sum(1) / cm.sum(1)
    srep = (sh * sm).sum(1) / jnp.maximum(sm.sum(1), 1.0)
    comb = jnp.concatenate([crep, srep, crep * srep], axis=1)
    h1 = jnp.maximum(comb @ params["w1"] + params["b1"], 0.0)
    h2 = jnp.maximum(h1 @ params["w2"] + params["b2"], 0.0)
    logits = h2 @ params["w3"] + params["b3"]
    scores = jax.nn.sigmoid(logits)
    nw = jax.nn.softmax(params["dim_weights"])
    return (scores * nw[None, :]).sum(1), scores


def init_params(key, vocab_size=64, hidden_size=32):
    ks = jax.random.split(key, 4)
    H = hidden_size
    scale = 0.02
    return {
        "embedding": scale * jax.random.normal(ks[0], (vocab_size, H), jnp.float32),
        "w1": scale * jax.random.normal(ks[1], (3 * H, 512), jnp.float32),
        "b1": jnp.zeros((1, 512), jnp.float32),
        "w2": scale * jax.random.normal(ks[2], (512, 256), jnp.float32),
        "b2": jnp.zeros((1, 256), jnp.float32),
        "w3": scale * jax.random.normal(ks[3], (256, 4), jnp.float32),
        "b3": jnp.zeros((1, 4), jnp.float32),
        # matches nn.Parameter(torch.tensor([1.5, 0.8, 1.0, 0.7]))
        "dim_weights": jnp.array([1.5, 0.8, 1.0, 0.7], jnp.float32),
    }


if __name__ == "__main__":
    key = jax.random.PRNGKey(0)
    pkey, k1, k2, k3 = jax.random.split(key, 4)

    B, S, H, VOCAB = 2, 8, 32, 64
    params = init_params(pkey, vocab_size=VOCAB, hidden_size=H)

    conflict_ids = jax.random.randint(k1, (B, S), 1, VOCAB, dtype=jnp.int32)
    solution_ids = jax.random.randint(k2, (B, S), 0, VOCAB, dtype=jnp.int32)  # 0 = pad
    attention_mask = (jax.random.uniform(k3, (B, S)) > 0.2).astype(jnp.float32)
    attention_mask = attention_mask.at[:, 0].set(1.0)  # >=1 valid token per row

    weighted_score, detailed_scores = merge_discriminator_forward(
        params, conflict_ids, solution_ids, attention_mask
    )
    jax.block_until_ready((weighted_score, detailed_scores))

    ref_w, ref_d = _reference_forward(params, conflict_ids, solution_ids, attention_mask)

    assert weighted_score.shape == (B,)
    assert detailed_scores.shape == (B, 4)
    assert bool(jnp.all(jnp.isfinite(weighted_score)))
    assert bool(jnp.all(jnp.isfinite(detailed_scores)))
    # bf16 operands / approx reciprocal => loose tolerance against f32 reference
    assert bool(jnp.allclose(weighted_score, ref_w, atol=2e-2, rtol=0.0))
    assert bool(jnp.allclose(detailed_scores, ref_d, atol=2e-2, rtol=0.0))
    print("KERNEL_OK")
</pallas_src>

<mosaic_0001>
module attributes {stable_mosaic.version = 11 : i64} {
  func.func @_discriminator_kernel(%arg0: i32, %arg1: memref<8x8x32xbf16, #tpu.memory_space<vmem>>, %arg2: memref<8x8xf32, #tpu.memory_space<vmem>>, %arg3: memref<8x8x32xbf16, #tpu.memory_space<vmem>>, %arg4: memref<8x8xf32, #tpu.memory_space<vmem>>, %arg5: memref<96x512xbf16, #tpu.memory_space<vmem>>, %arg6: memref<1x512xf32, #tpu.memory_space<vmem>>, %arg7: memref<512x256xbf16, #tpu.memory_space<vmem>>, %arg8: memref<1x256xf32, #tpu.memory_space<vmem>>, %arg9: memref<256x128xbf16, #tpu.memory_space<vmem>>, %arg10: memref<1x128xf32, #tpu.memory_space<vmem>>, %arg11: memref<8x128xf32, #tpu.memory_space<vmem>>) attributes {dimension_semantics = [#tpu.dimension_semantics<parallel>], iteration_bounds = array<i64: 1>, scalar_prefetch = 0 : i64, scratch_operands = 0 : i64, tpu.core_type = #tpu.core_type<tc>, window_params = [{transform_indices = @transform_0, window_bounds = array<i64: 8, 8, 32>}, {transform_indices = @transform_1, window_bounds = array<i64: 8, 8>}, {transform_indices = @transform_2, window_bounds = array<i64: 8, 8, 32>}, {transform_indices = @transform_3, window_bounds = array<i64: 8, 8>}, {pipeline_mode = #tpu.pipeline_mode<synchronous>, transform_indices = @transform_4, window_bounds = array<i64: 96, 512>}, {pipeline_mode = #tpu.pipeline_mode<synchronous>, transform_indices = @transform_5, window_bounds = array<i64: 1, 512>}, {pipeline_mode = #tpu.pipeline_mode<synchronous>, transform_indices = @transform_6, window_bounds = array<i64: 512, 256>}, {pipeline_mode = #tpu.pipeline_mode<synchronous>, transform_indices = @transform_7, window_bounds = array<i64: 1, 256>}, {pipeline_mode = #tpu.pipeline_mode<synchronous>, transform_indices = @transform_8, window_bounds = array<i64: 256, 128>}, {pipeline_mode = #tpu.pipeline_mode<synchronous>, transform_indices = @transform_9, window_bounds = array<i64: 1, 128>}, {transform_indices = @transform_10, window_bounds = array<i64: 8, 128>}]} {
    %c0 = arith.constant 0 : index
    %c0_0 = arith.constant 0 : index
    %c0_1 = arith.constant 0 : index
    %0 = vector.load %arg1[%c0, %c0_0, %c0_1] : memref<8x8x32xbf16, #tpu.memory_space<vmem>>, vector<8x8x32xbf16>
    %1 = arith.extf %0 : vector<8x8x32xbf16> to vector<8x8x32xf32>
    %c0_2 = arith.constant 0 : index
    %c0_3 = arith.constant 0 : index
    %c0_4 = arith.constant 0 : index
    %2 = vector.load %arg3[%c0_2, %c0_3, %c0_4] : memref<8x8x32xbf16, #tpu.memory_space<vmem>>, vector<8x8x32xbf16>
    %3 = arith.extf %2 : vector<8x8x32xbf16> to vector<8x8x32xf32>
    %c0_5 = arith.constant 0 : index
    %c0_6 = arith.constant 0 : index
    %4 = vector.load %arg2[%c0_5, %c0_6] : memref<8x8xf32, #tpu.memory_space<vmem>>, vector<8x8xf32>
    %5 = vector.shape_cast %4 : vector<8x8xf32> to vector<8x8x1xf32>
    %c0_7 = arith.constant 0 : index
    %c0_8 = arith.constant 0 : index
    %6 = vector.load %arg4[%c0_7, %c0_8] : memref<8x8xf32, #tpu.memory_space<vmem>>, vector<8x8xf32>
    %7 = vector.shape_cast %6 : vector<8x8xf32> to vector<8x8x1xf32>
    %cst = arith.constant dense<0.000000e+00> : vector<8x1xf32>
    %8 = vector.multi_reduction <add>, %5, %cst [1] : vector<8x8x1xf32> to vector<8x1xf32>
    %9 = tpu.reciprocal %8 {approx = true} : vector<8x1xf32> -> vector<8x1xf32>
    %cst_9 = arith.constant dense<0.000000e+00> : vector<8x1xf32>
    %10 = vector.multi_reduction <add>, %7, %cst_9 [1] : vector<8x8x1xf32> to vector<8x1xf32>
    %cst_10 = arith.constant 1.000000e+00 : f32
    %11 = vector.broadcast %cst_10 : f32 to vector<8x1xf32>
    %12 = arith.maximumf %10, %11 : vector<8x1xf32>
    %13 = tpu.reciprocal %12 {approx = true} : vector<8x1xf32> -> vector<8x1xf32>
    %14 = vector.broadcast %5 : vector<8x8x1xf32> to vector<8x8x32xf32>
    %15 = arith.mulf %1, %14 : vector<8x8x32xf32>
    %cst_11 = arith.constant dense<0.000000e+00> : vector<8x32xf32>
    %16 = vector.multi_reduction <add>, %15, %cst_11 [1] : vector<8x8x32xf32> to vector<8x32xf32>
    %17 = vector.broadcast %9 : vector<8x1xf32> to vector<8x32xf32>
    %18 = arith.mulf %16, %17 : vector<8x32xf32>
    %19 = vector.broadcast %7 : vector<8x8x1xf32> to vector<8x8x32xf32>
    %20 = arith.mulf %3, %19 : vector<8x8x32xf32>
    %cst_12 = arith.constant dense<0.000000e+00> : vector<8x32xf32>
    %21 = vector.multi_reduction <add>, %20, %cst_12 [1] : vector<8x8x32xf32> to vector<8x32xf32>
    %22 = vector.broadcast %13 : vector<8x1xf32> to vector<8x32xf32>
    %23 = arith.mulf %21, %22 : vector<8x32xf32>
    %24 = arith.truncf %18 : vector<8x32xf32> to vector<8x32xbf16>
    %25 = arith.truncf %23 : vector<8x32xf32> to vector<8x32xbf16>
    %26 = arith.mulf %18, %23 : vector<8x32xf32>
    %27 = arith.truncf %26 : vector<8x32xf32> to vector<8x32xbf16>
    %c0_13 = arith.constant 0 : index
    %c0_14 = arith.constant 0 : index
    %28 = vector.load %arg5[%c0_13, %c0_14] : memref<96x512xbf16, #tpu.memory_space<vmem>>, vector<32x512xbf16>
    %cst_15 = arith.constant dense<0.000000e+00> : vector<8x512xf32>
    %29 = tpu.matmul %24, %28, %cst_15 {dimension_numbers = #tpu.dot_dimension_numbers<[1], [0], [0], [1], [0, 0, 1, 1], [], []>} : vector<8x32xbf16>, vector<32x512xbf16>, vector<8x512xf32> -> vector<8x512xf32>
    %c32 = arith.constant 32 : index
    %c0_16 = arith.constant 0 : index
    %30 = vector.load %arg5[%c32, %c0_16] : memref<96x512xbf16, #tpu.memory_space<vmem>>, vector<32x512xbf16>
    %cst_17 = arith.constant dense<0.000000e+00> : vector<8x512xf32>
    %31 = tpu.matmul %25, %30, %cst_17 {dimension_numbers = #tpu.dot_dimension_numbers<[1], [0], [0], [1], [0, 0, 1, 1], [], []>} : vector<8x32xbf16>, vector<32x512xbf16>, vector<8x512xf32> -> vector<8x512xf32>
    %32 = arith.addf %29, %31 : vector<8x512xf32>
    %c64 = arith.constant 64 : index
    %c0_18 = arith.constant 0 : index
    %33 = vector.load %arg5[%c64, %c0_18] : memref<96x512xbf16, #tpu.memory_space<vmem>>, vector<32x512xbf16>
    %cst_19 = arith.constant dense<0.000000e+00> : vector<8x512xf32>
    %34 = tpu.matmul %27, %33, %cst_19 {dimension_numbers = #tpu.dot_dimension_numbers<[1], [0], [0], [1], [0, 0, 1, 1], [], []>} : vector<8x32xbf16>, vector<32x512xbf16>, vector<8x512xf32> -> vector<8x512xf32>
    %35 = arith.addf %32, %34 : vector<8x512xf32>
    %c0_20 = arith.constant 0 : index
    %c0_21 = arith.constant 0 : index
    %36 = vector.load %arg6[%c0_20, %c0_21] : memref<1x512xf32, #tpu.memory_space<vmem>>, vector<1x512xf32>
    %37 = vector.broadcast %36 : vector<1x512xf32> to vector<8x512xf32>
    %38 = arith.addf %35, %37 : vector<8x512xf32>
    %cst_22 = arith.constant 0.000000e+00 : f32
    %39 = vector.broadcast %cst_22 : f32 to vector<8x512xf32>
    %40 = arith.maximumf %38, %39 : vector<8x512xf32>
    %41 = arith.truncf %40 : vector<8x512xf32> to vector<8x512xbf16>
    %c0_23 = arith.constant 0 : index
    %c0_24 = arith.constant 0 : index
    %42 = vector.load %arg7[%c0_23, %c0_24] : memref<512x256xbf16, #tpu.memory_space<vmem>>, vector<512x256xbf16>
    %cst_25 = arith.constant dense<0.000000e+00> : vector<8x256xf32>
    %43 = tpu.matmul %41, %42, %cst_25 {dimension_numbers = #tpu.dot_dimension_numbers<[1], [0], [0], [1], [0, 0, 1, 1], [], []>} : vector<8x512xbf16>, vector<512x256xbf16>, vector<8x256xf32> -> vector<8x256xf32>
    %c0_26 = arith.constant 0 : index
    %c0_27 = arith.constant 0 : index
    %44 = vector.load %arg8[%c0_26, %c0_27] : memref<1x256xf32, #tpu.memory_space<vmem>>, vector<1x256xf32>
    %45 = vector.broadcast %44 : vector<1x256xf32> to vector<8x256xf32>
    %46 = arith.addf %43, %45 : vector<8x256xf32>
    %cst_28 = arith.constant 0.000000e+00 : f32
    %47 = vector.broadcast %cst_28 : f32 to vector<8x256xf32>
    %48 = arith.maximumf %46, %47 : vector<8x256xf32>
    %49 = arith.truncf %48 : vector<8x256xf32> to vector<8x256xbf16>
    %c0_29 = arith.constant 0 : index
    %c0_30 = arith.constant 0 : index
    %50 = vector.load %arg9[%c0_29, %c0_30] : memref<256x128xbf16, #tpu.memory_space<vmem>>, vector<256x128xbf16>
    %cst_31 = arith.constant dense<0.000000e+00> : vector<8x128xf32>
    %51 = tpu.matmul %49, %50, %cst_31 {dimension_numbers = #tpu.dot_dimension_numbers<[1], [0], [0], [1], [0, 0, 1, 1], [], []>} : vector<8x256xbf16>, vector<256x128xbf16>, vector<8x128xf32> -> vector<8x128xf32>
    %c0_32 = arith.constant 0 : index
    %c0_33 = arith.constant 0 : index
    %52 = vector.load %arg10[%c0_32, %c0_33] : memref<1x128xf32, #tpu.memory_space<vmem>>, vector<1x128xf32>
    %53 = vector.broadcast %52 : vector<1x128xf32> to vector<8x128xf32>
    %54 = arith.addf %51, %53 : vector<8x128xf32>
    %cst_34 = arith.constant 0.000000e+00 : f32
    %55 = vector.broadcast %cst_34 : f32 to vector<8x128xf32>
    %56 = arith.subf %55, %54 : vector<8x128xf32>
    %57 = math.exp %56 : vector<8x128xf32>
    %cst_35 = arith.constant 1.000000e+00 : f32
    %58 = vector.broadcast %cst_35 : f32 to vector<8x128xf32>
    %59 = arith.addf %58, %57 : vector<8x128xf32>
    %60 = tpu.reciprocal %59 {approx = true} : vector<8x128xf32> -> vector<8x128xf32>
    %c0_36 = arith.constant 0 : index
    %c0_37 = arith.constant 0 : index
    %61 = vector.load %arg11[%c0_36, %c0_37] : memref<8x128xf32, #tpu.memory_space<vmem>>, vector<8x128xf32>
    tpu.vector_store %arg11[%c0_36, %c0_37], %60 {strides = array<i32>} : memref<8x128xf32, #tpu.memory_space<vmem>>, vector<8x128xf32>,
    return
  }
  func.func @transform_0(%arg0: i32) -> (i32, i32, i32) {
    %c0_i32 = arith.constant 0 : i32
    %c0_i32_0 = arith.constant 0 : i32
    %c0_i32_1 = arith.constant 0 : i32
    return %arg0, %c0_i32, %c0_i32_0 : i32, i32, i32
  }
  func.func @transform_1(%arg0: i32) -> (i32, i32) {
    %c0_i32 = arith.constant 0 : i32
    %c0_i32_0 = arith.constant 0 : i32
    return %arg0, %c0_i32 : i32, i32
  }
  func.func @transform_2(%arg0: i32) -> (i32, i32, i32) {
    %c0_i32 = arith.constant 0 : i32
    %c0_i32_0 = arith.constant 0 : i32
    %c0_i32_1 = arith.constant 0 : i32
    return %arg0, %c0_i32, %c0_i32_0 : i32, i32, i32
  }
  func.func @transform_3(%arg0: i32) -> (i32, i32) {
    %c0_i32 = arith.constant 0 : i32
    %c0_i32_0 = arith.constant 0 : i32
    return %arg0, %c0_i32 : i32, i32
  }
  func.func @transform_4(%arg0: i32) -> (i32, i32) {
    %c0_i32 = arith.constant 0 : i32
    %c0_i32_0 = arith.constant 0 : i32
    %c0_i32_1 = arith.constant 0 : i32
    return %c0_i32, %c0_i32_0 : i32, i32
  }
  func.func @transform_5(%arg0: i32) -> (i32, i32) {
    %c0_i32 = arith.constant 0 : i32
    %c0_i32_0 = arith.constant 0 : i32
    %c0_i32_1 = arith.constant 0 : i32
    return %c0_i32, %c0_i32_0 : i32, i32
  }
  func.func @transform_6(%arg0: i32) -> (i32, i32) {
    %c0_i32 = arith.constant 0 : i32
    %c0_i32_0 = arith.constant 0 : i32
    %c0_i32_1 = arith.constant 0 : i32
    return %c0_i32, %c0_i32_0 : i32, i32
  }
  func.func @transform_7(%arg0: i32) -> (i32, i32) {
    %c0_i32 = arith.constant 0 : i32
    %c0_i32_0 = arith.constant 0 : i32
    %c0_i32_1 = arith.constant 0 : i32
    return %c0_i32, %c0_i32_0 : i32, i32
  }
  func.func @transform_8(%arg0: i32) -> (i32, i32) {
    %c0_i32 = arith.constant 0 : i32
    %c0_i32_0 = arith.constant 0 : i32
    %c0_i32_1 = arith.constant 0 : i32
    return %c0_i32, %c0_i32_0 : i32, i32
  }
  func.func @transform_9(%arg0: i32) -> (i32, i32) {
    %c0_i32 = arith.constant 0 : i32
    %c0_i32_0 = arith.constant 0 : i32
    %c0_i32_1 = arith.constant 0 : i32
    return %c0_i32, %c0_i32_0 : i32, i32
  }
  func.func @transform_10(%arg0: i32) -> (i32, i32) {
    %c0_i32 = arith.constant 0 : i32
    %c0_i32_0 = arith.constant 0 : i32
    return %arg0, %c0_i32 : i32, i32
  }
}

</mosaic_0001>

<llo_original>
// kernel: tpu_custom_call.1
$region0: #{tpu_custom_call.1}
  #allocation0 [shape = 'u32[]', space=smem, size = 0x4, offset = 0x4, fixed_abs, tag = 'smem constant byte address 0x4 - core index']
  #allocation1 [shape = 'u32[144,128]{1,0:T(1,128)}', space=vmem, size = 0x12000, scoped, tag = 'internal scratch']
  %s0 = inlined_call_operand.hbm [shape: bf16[8,8,32], index: 0, kind: input, shape index: {}]
  %s1 = inlined_call_operand.hbm [shape: f32[8,8], index: 1, kind: input, shape index: {}]
  %s2 = inlined_call_operand.hbm [shape: bf16[8,8,32], index: 2, kind: input, shape index: {}]
  %s3 = inlined_call_operand.vmem [shape: f32[8,8], index: 3, kind: input, shape index: {}]
  %s4 = inlined_call_operand.hbm [shape: bf16[96,512], index: 4, kind: input, shape index: {}]
  %s5 = inlined_call_operand.vmem [shape: f32[1,512], index: 5, kind: input, shape index: {}]
  %s6 = inlined_call_operand.hbm [shape: bf16[512,256], index: 6, kind: input, shape index: {}]
  %s7 = inlined_call_operand.vmem [shape: f32[1,256], index: 7, kind: input, shape index: {}]
  %s8 = inlined_call_operand.hbm [shape: bf16[256,128], index: 8, kind: input, shape index: {}]
  %s9 = inlined_call_operand.vmem [shape: f32[1,128], index: 9, kind: input, shape index: {}]
  %s10 = inlined_call_operand.hbm [shape: f32[8,128], index: 10, kind: output, shape index: {}]
  %s11 = sld [smem:[#allocation0]]
  $region74: #{tpu_custom_call.1} parent=0
    _
  %s13 = ssub.s32 1, %s11
  %s14 = scalar_select 0, %s13, %s11
  $region1: #{tpu_custom_call.1} parent=0
    #allocation2 [shape = 'u8[16384]{0}', space=vmem, size = 0x4000, scoped, tag = 'input window, operand 0, single buffered']
    #allocation3 [shape = 's32[1]{0}', space=sflag, size = 0x4, scoped, tag = 'scoped memory for tpu_custom_call.1']
    #allocation4 [shape = 's32[1]{0}', space=sflag, size = 0x4, scoped, tag = 'scoped memory for tpu_custom_call.1']
    #allocation5 [shape = 'u8[4096]{0}', space=vmem, size = 0x1000, scoped, tag = 'input window, operand 1, single buffered']
    #allocation6 [shape = 's32[1]{0}', space=sflag, size = 0x4, scoped, tag = 'scoped memory for tpu_custom_call.1']
    #allocation7 [shape = 'u8[16384]{0}', space=vmem, size = 0x4000, scoped, tag = 'input window, operand 2, single buffered']
    #allocation8 [shape = 'u8[98304]{0}', space=vmem, size = 0x18000, scoped, tag = 'input window, operand 4, single buffered']
    #allocation9 [shape = 's32[1]{0}', space=sflag, size = 0x4, scoped, tag = 'scoped memory for tpu_custom_call.1']
    #allocation10 [shape = 'u8[262144]{0}', space=vmem, size = 0x40000, scoped, tag = 'input window, operand 6, single buffered']
    #allocation11 [shape = 'u8[65536]{0}', space=vmem, size = 0x10000, scoped, tag = 'input window, operand 8, single buffered']
    #allocation12 [shape = 's32[1]{0}', space=sflag, size = 0x4, scoped, tag = 'scoped memory for tpu_custom_call.1']
    #allocation13 [shape = 'u8[4096]{0}', space=vmem, size = 0x1000, scoped, tag = 'output window, operand 0, single buffered']
    %15 = vsyncpa [#allocation3], 0
    %16 = vsyncpa [#allocation6], 0
    %17 = vsyncpa [#allocation9], 0
    %18 = vsyncpa [#allocation12], 0
    %19 = vsyncpa [#allocation4], 0
    // Predicated region
    $region2: #{tpu_custom_call.1} parent=1 // pred_check
      _
    $region3: #{tpu_custom_call.1} parent=1 // pred_check_branch
      %21 = sbr.rel (0) target = $region5
    $region4: #{tpu_custom_call.1} parent=1 // pred_region
      %s23 = ssub.s32 512, 512
      %24 = vsyncadd [#allocation3], %s23
      %s25 = sshll.u32 [#allocation2], 4
      %s26 = int_to_ptr.vmem [resolvable:$true] %s25
      %31 = dma.hbm_to_vmem [thread:$0]  %s0, 512, %s26, [#allocation3], 64, 64, 4
    $region5: #{tpu_custom_call.1} parent=1 // pred_fallthru
      _
    // Predicated region
    $region6: #{tpu_custom_call.1} parent=1 // pred_check
      _
    $region7: #{tpu_custom_call.1} parent=1 // pred_check_branch
      %33 = sbr.rel (0) target = $region9
    $region8: #{tpu_custom_call.1} parent=1 // pred_region
      %s35 = ssub.s32 128, 128
      %36 = vsyncadd [#allocation6], %s35
      %s38 = sshll.u32 [#allocation5], 4
      %s39 = int_to_ptr.vmem [resolvable:$true] %s38
      %41 = dma.hbm_to_vmem [thread:$0]  %s1, 128, %s39, [#allocation6]
    $region9: #{tpu_custom_call.1} parent=1 // pred_fallthru
      _
    // Predicated region
    $region10: #{tpu_custom_call.1} parent=1 // pred_check
      _
    $region11: #{tpu_custom_call.1} parent=1 // pred_check_branch
      %43 = sbr.rel (0) target = $region13
    $region12: #{tpu_custom_call.1} parent=1 // pred_region
      %s45 = ssub.s32 512, 512
      %46 = vsyncadd [#allocation6], %s45
      %s47 = sshll.u32 [#allocation7], 4
      %s48 = int_to_ptr.vmem [resolvable:$true] %s47
      %53 = dma.hbm_to_vmem [thread:$0]  %s2, 512, %s48, [#allocation6], 64, 64, 4
    $region13: #{tpu_custom_call.1} parent=1 // pred_fallthru
      _
    // Predicated region
    $region14: #{tpu_custom_call.1} parent=1 // pred_check
      _
    $region15: #{tpu_custom_call.1} parent=1 // pred_check_branch
      %55 = sbr.rel (0) target = $region17
    $region16: #{tpu_custom_call.1} parent=1 // pred_region
      _
    $region17: #{tpu_custom_call.1} parent=1 // pred_fallthru
      _
    // Predicated region
    $region18: #{tpu_custom_call.1} parent=1 // pred_check
      _
    $region19: #{tpu_custom_call.1} parent=1 // pred_check_branch
      %57 = sbr.rel (0) target = $region21
    $region20: #{tpu_custom_call.1} parent=1 // pred_region
      %s59 = ssub.s32 3072, 3072
      %60 = vsyncadd [#allocation9], %s59
      %s61 = sshll.u32 [#allocation8], 4
      %s62 = int_to_ptr.vmem [resolvable:$true] %s61
      %67 = dma.hbm_to_vmem [thread:$0]  %s4, 3072, %s62, [#allocation9], 256, 256, 16
    $region21: #{tpu_custom_call.1} parent=1 // pred_fallthru
      _
    // Predicated region
    $region22: #{tpu_custom_call.1} parent=1 // pred_check
      _
    $region23: #{tpu_custom_call.1} parent=1 // pred_check_branch
      %69 = sbr.rel (0) target = $region25
    $region24: #{tpu_custom_call.1} parent=1 // pred_region
      _
    $region25: #{tpu_custom_call.1} parent=1 // pred_fallthru
      _
    // Predicated region
    $region26: #{tpu_custom_call.1} parent=1 // pred_check
      _
    $region27: #{tpu_custom_call.1} parent=1 // pred_check_branch
      %71 = sbr.rel (0) target = $region29
    $region28: #{tpu_custom_call.1} parent=1 // pred_region
      %s73 = ssub.s32 8192, 8192
      %74 = vsyncadd [#allocation9], %s73
      %s75 = sshll.u32 [#allocation10], 4
      %s76 = int_to_ptr.vmem [resolvable:$true] %s75
      %81 = dma.hbm_to_vmem [thread:$0]  %s6, 8192, %s76, [#allocation9], 128, 128, 8
    $region29: #{tpu_custom_call.1} parent=1 // pred_fallthru
      _
    // Predicated region
    $region30: #{tpu_custom_call.1} parent=1 // pred_check
      _
    $region31: #{tpu_custom_call.1} parent=1 // pred_check_branch
      %83 = sbr.rel (0) target = $region33
    $region32: #{tpu_custom_call.1} parent=1 // pred_region
      _
    $region33: #{tpu_custom_call.1} parent=1 // pred_fallthru
      _
    // Predicated region
    $region34: #{tpu_custom_call.1} parent=1 // pred_check
      _
    $region35: #{tpu_custom_call.1} parent=1 // pred_check_branch
      %85 = sbr.rel (0) target = $region37
    $region36: #{tpu_custom_call.1} parent=1 // pred_region
      %s87 = ssub.s32 2048, 2048
      %88 = vsyncadd [#allocation12], %s87
      %s89 = sshll.u32 [#allocation11], 4
      %s90 = int_to_ptr.vmem [resolvable:$true] %s89
      %95 = dma.hbm_to_vmem [thread:$0]  %s8, 2048, %s90, [#allocation12], 64, 64, 4
    $region37: #{tpu_custom_call.1} parent=1 // pred_fallthru
      _
    // Predicated region
    $region38: #{tpu_custom_call.1} parent=1 // pred_check
      _
    $region39: #{tpu_custom_call.1} parent=1 // pred_check_branch
      %97 = sbr.rel (0) target = $region41
    $region40: #{tpu_custom_call.1} parent=1 // pred_region
      _
    $region41: #{tpu_custom_call.1} parent=1 // pred_fallthru
      _
    // Predicated region
    $region42: #{tpu_custom_call.1} parent=1 // pred_check
      _
    $region43: #{tpu_custom_call.1} parent=1 // pred_check_branch
      %99 = sbr.rel (0) target = $region45
    $region44: #{tpu_custom_call.1} parent=1 // pred_region
      %100 = dma.done [#allocation3], 512
    $region45: #{tpu_custom_call.1} parent=1 // pred_fallthru
      _
    // Predicated region
    $region46: #{tpu_custom_call.1} parent=1 // pred_check
      _
    $region47: #{tpu_custom_call.1} parent=1 // pred_check_branch
      %102 = sbr.rel (0) target = $region49
    $region48: #{tpu_custom_call.1} parent=1 // pred_region
      %103 = dma.done [#allocation6], 128
    $region49: #{tpu_custom_call.1} parent=1 // pred_fallthru
      _
    // Predicated region
    $region50: #{tpu_custom_call.1} parent=1 // pred_check
      _
    $region51: #{tpu_custom_call.1} parent=1 // pred_check_branch
      %105 = sbr.rel (0) target = $region53
    $region52: #{tpu_custom_call.1} parent=1 // pred_region
      %106 = dma.done [#allocation6], 512
    $region53: #{tpu_custom_call.1} parent=1 // pred_fallthru
      _
    // Predicated region
    $region54: #{tpu_custom_call.1} parent=1 // pred_check
      _
    $region55: #{tpu_custom_call.1} parent=1 // pred_check_branch
      %108 = sbr.rel (0) target = $region57
    $region56: #{tpu_custom_call.1} parent=1 // pred_region
      %109 = dma.done [#allocation9], 3072
    $region57: #{tpu_custom_call.1} parent=1 // pred_fallthru
      _
    // Predicated region
    $region58: #{tpu_custom_call.1} parent=1 // pred_check
      _
    $region59: #{tpu_custom_call.1} parent=1 // pred_check_branch
      %111 = sbr.rel (0) target = $region61
    $region60: #{tpu_custom_call.1} parent=1 // pred_region
      %112 = dma.done [#allocation9], 8192
    $region61: #{tpu_custom_call.1} parent=1 // pred_fallthru
      _
    // Predicated region
    $region62: #{tpu_custom_call.1} parent=1 // pred_check
      _
    $region63: #{tpu_custom_call.1} parent=1 // pred_check_branch
      %114 = sbr.rel (0) target = $region65
    $region64: #{tpu_custom_call.1} parent=1 // pred_region
      %115 = dma.done [#allocation12], 2048
    $region65: #{tpu_custom_call.1} parent=1 // pred_fallthru
      _
    %v117 = vld [vmem:[#allocation2] sm:$0xf]
    %v118 = vld [vmem:[#allocation2 + $0x4] sm:$0xf]
    %v119 = vld [vmem:[#allocation2 + $0x8] sm:$0xf]
    %v120 = vld [vmem:[#allocation2 + $0xc] sm:$0xf]
    %v121 = vld [vmem:[#allocation2 + $0x10] sm:$0xf]
    %v122 = vld [vmem:[#allocation2 + $0x14] sm:$0xf]
    %v123 = vld [vmem:[#allocation2 + $0x18] sm:$0xf]
    %v124 = vld [vmem:[#allocation2 + $0x1c] sm:$0xf]
    %v125 = vunpack.c.l.bf16 %v117
    %v126 = vunpack.c.l.bf16 %v118
    %v127 = vunpack.c.l.bf16 %v119
    %v128 = vunpack.c.l.bf16 %v120
    %v129 = vunpack.c.l.bf16 %v121
    %v130 = vunpack.c.l.bf16 %v122
    %v131 = vunpack.c.l.bf16 %v123
    %v132 = vunpack.c.l.bf16 %v124
    %v133 = vld [vmem:[#allocation7] sm:$0xf]
    %v134 = vld [vmem:[#allocation7 + $0x4] sm:$0xf]
    %v135 = vld [vmem:[#allocation7 + $0x8] sm:$0xf]
    %v136 = vld [vmem:[#allocation7 + $0xc] sm:$0xf]
    %v137 = vld [vmem:[#allocation7 + $0x10] sm:$0xf]
    %v138 = vld [vmem:[#allocation7 + $0x14] sm:$0xf]
    %v139 = vld [vmem:[#allocation7 + $0x18] sm:$0xf]
    %v140 = vld [vmem:[#allocation7 + $0x1c] sm:$0xf]
    %v141 = vunpack.c.l.bf16 %v133
    %v142 = vunpack.c.l.bf16 %v134
    %v143 = vunpack.c.l.bf16 %v135
    %v144 = vunpack.c.l.bf16 %v136
    %v145 = vunpack.c.l.bf16 %v137
    %v146 = vunpack.c.l.bf16 %v138
    %v147 = vunpack.c.l.bf16 %v139
    %v148 = vunpack.c.l.bf16 %v140
    %v149 = vld [vmem:[#allocation5] sm:$0xff]
    %v150 = vlaneseq
    %v151 = vshrl.u32 %v150, 7
    %v152 = vsub.s32 0, %v151
    %v153 = vrot.slane %v149, %v152
    %155 = vbcast.lane.b32.xlu0 %v153, 256
    %v156 = vpop.permute.xlu0 %155
    %v157 = vlaneseq
    %v158 = vshrl.u32 %v157, 7
    %v159 = vsub.s32 1, %v158
    %v160 = vrot.slane %v149, %v159
    %162 = vbcast.lane.b32.xlu0 %v160, 256
    %v163 = vpop.permute.xlu0 %162
    %v164 = vlaneseq
    %v165 = vshrl.u32 %v164, 7
    %v166 = vsub.s32 2, %v165
    %v167 = vrot.slane %v149, %v166
    %169 = vbcast.lane.b32.xlu0 %v167, 256
    %v170 = vpop.permute.xlu0 %169
    %v171 = vlaneseq
    %v172 = vshrl.u32 %v171, 7
    %v173 = vsub.s32 3, %v172
    %v174 = vrot.slane %v149, %v173
    %176 = vbcast.lane.b32.xlu0 %v174, 256
    %v177 = vpop.permute.xlu0 %176
    %v178 = vlaneseq
    %v179 = vshrl.u32 %v178, 7
    %v180 = vsub.s32 4, %v179
    %v181 = vrot.slane %v149, %v180
    %183 = vbcast.lane.b32.xlu0 %v181, 256
    %v184 = vpop.permute.xlu0 %183
    %v185 = vlaneseq
    %v186 = vshrl.u32 %v185, 7
    %v187 = vsub.s32 5, %v186
    %v188 = vrot.slane %v149, %v187
    %190 = vbcast.lane.b32.xlu0 %v188, 256
    %v191 = vpop.permute.xlu0 %190
    %v192 = vlaneseq
    %v193 = vshrl.u32 %v192, 7
    %v194 = vsub.s32 6, %v193
    %v195 = vrot.slane %v149, %v194
    %197 = vbcast.lane.b32.xlu0 %v195, 256
    %v198 = vpop.permute.xlu0 %197
    %v199 = vlaneseq
    %v200 = vshrl.u32 %v199, 7
    %v201 = vsub.s32 7, %v200
    %v202 = vrot.slane %v149, %v201
    %204 = vbcast.lane.b32.xlu0 %v202, 256
    %v205 = vpop.permute.xlu0 %204
    %v206 = vld [vmem:[%s3] sm:$0xff]
    %v207 = vlaneseq
    %v208 = vshrl.u32 %v207, 7
    %v209 = vsub.s32 0, %v208
    %v210 = vrot.slane %v206, %v209
    %212 = vbcast.lane.b32.xlu0 %v210, 256
    %v213 = vpop.permute.xlu0 %212
    %v214 = vlaneseq
    %v215 = vshrl.u32 %v214, 7
    %v216 = vsub.s32 1, %v215
    %v217 = vrot.slane %v206, %v216
    %219 = vbcast.lane.b32.xlu0 %v217, 256
    %v220 = vpop.permute.xlu0 %219
    %v221 = vlaneseq
    %v222 = vshrl.u32 %v221, 7
    %v223 = vsub.s32 2, %v222
    %v224 = vrot.slane %v206, %v223
    %226 = vbcast.lane.b32.xlu0 %v224, 256
    %v227 = vpop.permute.xlu0 %226
    %v228 = vlaneseq
    %v229 = vshrl.u32 %v228, 7
    %v230 = vsub.s32 3, %v229
    %v231 = vrot.slane %v206, %v230
    %233 = vbcast.lane.b32.xlu0 %v231, 256
    %v234 = vpop.permute.xlu0 %233
    %v235 = vlaneseq
    %v236 = vshrl.u32 %v235, 7
    %v237 = vsub.s32 4, %v236
    %v238 = vrot.slane %v206, %v237
    %240 = vbcast.lane.b32.xlu0 %v238, 256
    %v241 = vpop.permute.xlu0 %240
    %v242 = vlaneseq
    %v243 = vshrl.u32 %v242, 7
    %v244 = vsub.s32 5, %v243
    %v245 = vrot.slane %v206, %v244
    %247 = vbcast.lane.b32.xlu0 %v245, 256
    %v248 = vpop.permute.xlu0 %247
    %v249 = vlaneseq
    %v250 = vshrl.u32 %v249, 7
    %v251 = vsub.s32 6, %v250
    %v252 = vrot.slane %v206, %v251
    %254 = vbcast.lane.b32.xlu0 %v252, 256
    %v255 = vpop.permute.xlu0 %254
    %v256 = vlaneseq
    %v257 = vshrl.u32 %v256, 7
    %v258 = vsub.s32 7, %v257
    %v259 = vrot.slane %v206, %v258
    %261 = vbcast.lane.b32.xlu0 %v259, 256
    %v262 = vpop.permute.xlu0 %261
    %v263 = vrot.slane %v156, 4
    %v264 = vadd.f32 %v156, %v263
    %v265 = vrot.slane %v264, 2
    %v266 = vadd.f32 %v264, %v265
    %v267 = vrot.slane %v266, 1
    %v268 = vadd.f32 %v266, %v267
    %v269 = vrot.slane %v163, 4
    %v270 = vadd.f32 %v163, %v269
    %v271 = vrot.slane %v270, 2
    %v272 = vadd.f32 %v270, %v271
    %v273 = vrot.slane %v272, 1
    %v274 = vadd.f32 %v272, %v273
    %v275 = vrot.slane %v170, 4
    %v276 = vadd.f32 %v170, %v275
    %v277 = vrot.slane %v276, 2
    %v278 = vadd.f32 %v276, %v277
    %v279 = vrot.slane %v278, 1
    %v280 = vadd.f32 %v278, %v279
    %v281 = vrot.slane %v177, 4
    %v282 = vadd.f32 %v177, %v281
    %v283 = vrot.slane %v282, 2
    %v284 = vadd.f32 %v282, %v283
    %v285 = vrot.slane %v284, 1
    %v286 = vadd.f32 %v284, %v285
    %v287 = vrot.slane %v184, 4
    %v288 = vadd.f32 %v184, %v287
    %v289 = vrot.slane %v288, 2
    %v290 = vadd.f32 %v288, %v289
    %v291 = vrot.slane %v290, 1
    %v292 = vadd.f32 %v290, %v291
    %v293 = vrot.slane %v191, 4
    %v294 = vadd.f32 %v191, %v293
    %v295 = vrot.slane %v294, 2
    %v296 = vadd.f32 %v294, %v295
    %v297 = vrot.slane %v296, 1
    %v298 = vadd.f32 %v296, %v297
    %v299 = vrot.slane %v198, 4
    %v300 = vadd.f32 %v198, %v299
    %v301 = vrot.slane %v300, 2
    %v302 = vadd.f32 %v300, %v301
    %v303 = vrot.slane %v302, 1
    %v304 = vadd.f32 %v302, %v303
    %v305 = vrot.slane %v205, 4
    %v306 = vadd.f32 %v205, %v305
    %v307 = vrot.slane %v306, 2
    %v308 = vadd.f32 %v306, %v307
    %v309 = vrot.slane %v308, 1
    %v310 = vadd.f32 %v308, %v309
    %v311 = vrcp.pop %v268
    %v312 = vrcp.pop %v274
    %v313 = vrcp.pop %v280
    %v314 = vrcp.pop %v286
    %v315 = vrcp.pop %v292
    %v316 = vrcp.pop %v298
    %v317 = vrcp.pop %v304
    %v318 = vrcp.pop %v310
    %v319 = vrot.slane %v213, 4
    %v320 = vadd.f32 %v213, %v319
    %v321 = vrot.slane %v320, 2
    %v322 = vadd.f32 %v320, %v321
    %v323 = vrot.slane %v322, 1
    %v324 = vadd.f32 %v322, %v323
    %v325 = vrot.slane %v220, 4
    %v326 = vadd.f32 %v220, %v325
    %v327 = vrot.slane %v326, 2
    %v328 = vadd.f32 %v326, %v327
    %v329 = vrot.slane %v328, 1
    %v330 = vadd.f32 %v328, %v329
    %v331 = vrot.slane %v227, 4
    %v332 = vadd.f32 %v227, %v331
    %v333 = vrot.slane %v332, 2
    %v334 = vadd.f32 %v332, %v333
    %v335 = vrot.slane %v334, 1
    %v336 = vadd.f32 %v334, %v335
    %v337 = vrot.slane %v234, 4
    %v338 = vadd.f32 %v234, %v337
    %v339 = vrot.slane %v338, 2
    %v340 = vadd.f32 %v338, %v339
    %v341 = vrot.slane %v340, 1
    %v342 = vadd.f32 %v340, %v341
    %v343 = vrot.slane %v241, 4
    %v344 = vadd.f32 %v241, %v343
    %v345 = vrot.slane %v344, 2
    %v346 = vadd.f32 %v344, %v345
    %v347 = vrot.slane %v346, 1
    %v348 = vadd.f32 %v346, %v347
    %v349 = vrot.slane %v248, 4
    %v350 = vadd.f32 %v248, %v349
    %v351 = vrot.slane %v350, 2
    %v352 = vadd.f32 %v350, %v351
    %v353 = vrot.slane %v352, 1
    %v354 = vadd.f32 %v352, %v353
    %v355 = vrot.slane %v255, 4
    %v356 = vadd.f32 %v255, %v355
    %v357 = vrot.slane %v356, 2
    %v358 = vadd.f32 %v356, %v357
    %v359 = vrot.slane %v358, 1
    %v360 = vadd.f32 %v358, %v359
    %v361 = vrot.slane %v262, 4
    %v362 = vadd.f32 %v262, %v361
    %v363 = vrot.slane %v362, 2
    %v364 = vadd.f32 %v362, %v363
    %v365 = vrot.slane %v364, 1
    %v366 = vadd.f32 %v364, %v365
    %v367 = vmax.f32 %v324, 1.0
    %v368 = vmax.f32 %v330, 1.0
    %v369 = vmax.f32 %v336, 1.0
    %v370 = vmax.f32 %v342, 1.0
    %v371 = vmax.f32 %v348, 1.0
    %v372 = vmax.f32 %v354, 1.0
    %v373 = vmax.f32 %v360, 1.0
    %v374 = vmax.f32 %v366, 1.0
    %v375 = vrcp.pop %v367
    %v376 = vrcp.pop %v368
    %v377 = vrcp.pop %v369
    %v378 = vrcp.pop %v370
    %v379 = vrcp.pop %v371
    %v380 = vrcp.pop %v372
    %v381 = vrcp.pop %v373
    %v382 = vrcp.pop %v374
    %v383 = vmul.f32 %v125, %v156
    %v384 = vmul.f32 %v126, %v163
    %v385 = vmul.f32 %v127, %v170
    %v386 = vmul.f32 %v128, %v177
    %v387 = vmul.f32 %v129, %v184
    %v388 = vmul.f32 %v130, %v191
    %v389 = vmul.f32 %v131, %v198
    %v390 = vmul.f32 %v132, %v205
    %vm391 = vcmask 261120
    %v392 = vsel %vm391, %v383, 0.0
    %v393 = vrot.slane %v392, 4
    %v394 = vadd.f32 %v392, %v393
    %v395 = vrot.slane %v394, 2
    %v396 = vadd.f32 %v394, %v395
    %v397 = vrot.slane %v396, 1
    %v398 = vadd.f32 %v396, %v397
    %v399 = vsel %vm391, %v384, 0.0
    %v400 = vrot.slane %v399, 4
    %v401 = vadd.f32 %v399, %v400
    %v402 = vrot.slane %v401, 2
    %v403 = vadd.f32 %v401, %v402
    %v404 = vrot.slane %v403, 1
    %v405 = vadd.f32 %v403, %v404
    %v406 = vsel %vm391, %v385, 0.0
    %v407 = vrot.slane %v406, 4
    %v408 = vadd.f32 %v406, %v407
    %v409 = vrot.slane %v408, 2
    %v410 = vadd.f32 %v408, %v409
    %v411 = vrot.slane %v410, 1
    %v412 = vadd.f32 %v410, %v411
    %v413 = vsel %vm391, %v386, 0.0
    %v414 = vrot.slane %v413, 4
    %v415 = vadd.f32 %v413, %v414
    %v416 = vrot.slane %v415, 2
    %v417 = vadd.f32 %v415, %v416
    %v418 = vrot.slane %v417, 1
    %v419 = vadd.f32 %v417, %v418
    %v420 = vsel %vm391, %v387, 0.0
    %v421 = vrot.slane %v420, 4
    %v422 = vadd.f32 %v420, %v421
    %v423 = vrot.slane %v422, 2
    %v424 = vadd.f32 %v422, %v423
    %v425 = vrot.slane %v424, 1
    %v426 = vadd.f32 %v424, %v425
    %v427 = vsel %vm391, %v388, 0.0
    %v428 = vrot.slane %v427, 4
    %v429 = vadd.f32 %v427, %v428
    %v430 = vrot.slane %v429, 2
    %v431 = vadd.f32 %v429, %v430
    %v432 = vrot.slane %v431, 1
    %v433 = vadd.f32 %v431, %v432
    %v434 = vsel %vm391, %v389, 0.0
    %v435 = vrot.slane %v434, 4
    %v436 = vadd.f32 %v434, %v435
    %v437 = vrot.slane %v436, 2
    %v438 = vadd.f32 %v436, %v437
    %v439 = vrot.slane %v438, 1
    %v440 = vadd.f32 %v438, %v439
    %v441 = vsel %vm391, %v390, 0.0
    %v442 = vrot.slane %v441, 4
    %v443 = vadd.f32 %v441, %v442
    %v444 = vrot.slane %v443, 2
    %v445 = vadd.f32 %v443, %v444
    %v446 = vrot.slane %v445, 1
    %v447 = vadd.f32 %v445, %v446
    %v448 = vmul.f32 %v398, %v311
    %v449 = vmul.f32 %v405, %v312
    %v450 = vmul.f32 %v412, %v313
    %v451 = vmul.f32 %v419, %v314
    %v452 = vmul.f32 %v426, %v315
    %v453 = vmul.f32 %v433, %v316
    %v454 = vmul.f32 %v440, %v317
    %v455 = vmul.f32 %v447, %v318
    %v456 = vmul.f32 %v141, %v213
    %v457 = vmul.f32 %v142, %v220
    %v458 = vmul.f32 %v143, %v227
    %v459 = vmul.f32 %v144, %v234
    %v460 = vmul.f32 %v145, %v241
    %v461 = vmul.f32 %v146, %v248
    %v462 = vmul.f32 %v147, %v255
    %v463 = vmul.f32 %v148, %v262
    %v464 = vsel %vm391, %v456, 0.0
    %v465 = vrot.slane %v464, 4
    %v466 = vadd.f32 %v464, %v465
    %v467 = vrot.slane %v466, 2
    %v468 = vadd.f32 %v466, %v467
    %v469 = vrot.slane %v468, 1
    %v470 = vadd.f32 %v468, %v469
    %v471 = vsel %vm391, %v457, 0.0
    %v472 = vrot.slane %v471, 4
    %v473 = vadd.f32 %v471, %v472
    %v474 = vrot.slane %v473, 2
    %v475 = vadd.f32 %v473, %v474
    %v476 = vrot.slane %v475, 1
    %v477 = vadd.f32 %v475, %v476
    %v478 = vsel %vm391, %v458, 0.0
    %v479 = vrot.slane %v478, 4
    %v480 = vadd.f32 %v478, %v479
    %v481 = vrot.slane %v480, 2
    %v482 = vadd.f32 %v480, %v481
    %v483 = vrot.slane %v482, 1
    %v484 = vadd.f32 %v482, %v483
    %v485 = vsel %vm391, %v459, 0.0
    %v486 = vrot.slane %v485, 4
    %v487 = vadd.f32 %v485, %v486
    %v488 = vrot.slane %v487, 2
    %v489 = vadd.f32 %v487, %v488
    %v490 = vrot.slane %v489, 1
    %v491 = vadd.f32 %v489, %v490
    %v492 = vsel %vm391, %v460, 0.0
    %v493 = vrot.slane %v492, 4
    %v494 = vadd.f32 %v492, %v493
    %v495 = vrot.slane %v494, 2
    %v496 = vadd.f32 %v494, %v495
    %v497 = vrot.slane %v496, 1
    %v498 = vadd.f32 %v496, %v497
    %v499 = vsel %vm391, %v461, 0.0
    %v500 = vrot.slane %v499, 4
    %v501 = vadd.f32 %v499, %v500
    %v502 = vrot.slane %v501, 2
    %v503 = vadd.f32 %v501, %v502
    %v504 = vrot.slane %v503, 1
    %v505 = vadd.f32 %v503, %v504
    %v506 = vsel %vm391, %v462, 0.0
    %v507 = vrot.slane %v506, 4
    %v508 = vadd.f32 %v506, %v507
    %v509 = vrot.slane %v508, 2
    %v510 = vadd.f32 %v508, %v509
    %v511 = vrot.slane %v510, 1
    %v512 = vadd.f32 %v510, %v511
    %v513 = vsel %vm391, %v463, 0.0
    %v514 = vrot.slane %v513, 4
    %v515 = vadd.f32 %v513, %v514
    %v516 = vrot.slane %v515, 2
    %v517 = vadd.f32 %v515, %v516
    %v518 = vrot.slane %v517, 1
    %v519 = vadd.f32 %v517, %v518
    %v520 = vmul.f32 %v470, %v375
    %v521 = vmul.f32 %v477, %v376
    %v522 = vmul.f32 %v484, %v377
    %v523 = vmul.f32 %v491, %v378
    %v524 = vmul.f32 %v498, %v379
    %v525 = vmul.f32 %v505, %v380
    %v526 = vmul.f32 %v512, %v381
    %v527 = vmul.f32 %v519, %v382
    %v528 = vpack.c.bf16 %v448, %v448
    %v529 = vpack.c.bf16 %v449, %v449
    %v530 = vpack.c.bf16 %v450, %v450
    %v531 = vpack.c.bf16 %v451, %v451
    %v532 = vpack.c.bf16 %v452, %v452
    %v533 = vpack.c.bf16 %v453, %v453
    %v534 = vpack.c.bf16 %v454, %v454
    %v535 = vpack.c.bf16 %v455, %v455
    %v536 = vpack.c.bf16 %v520, %v520
    %v537 = vpack.c.bf16 %v521, %v521
    %v538 = vpack.c.bf16 %v522, %v522
    %v539 = vpack.c.bf16 %v523, %v523
    %v540 = vpack.c.bf16 %v524, %v524
    %v541 = vpack.c.bf16 %v525, %v525
    %v542 = vpack.c.bf16 %v526, %v526
    %v543 = vpack.c.bf16 %v527, %v527
    %v544 = vmul.f32 %v448, %v520
    %v545 = vmul.f32 %v449, %v521
    %v546 = vmul.f32 %v450, %v522
    %v547 = vmul.f32 %v451, %v523
    %v548 = vmul.f32 %v452, %v524
    %v549 = vmul.f32 %v453, %v525
    %v550 = vmul.f32 %v454, %v526
    %v551 = vmul.f32 %v455, %v527
    %v552 = vpack.c.bf16 %v544, %v544
    %v553 = vpack.c.bf16 %v545, %v545
    %v554 = vpack.c.bf16 %v546, %v546
    %v555 = vpack.c.bf16 %v547, %v547
    %v556 = vpack.c.bf16 %v548, %v548
    %v557 = vpack.c.bf16 %v549, %v549
    %v558 = vpack.c.bf16 %v550, %v550
    %v559 = vpack.c.bf16 %v551, %v551
    %v560 = vld [vmem:[#allocation8] sm:$0xff]
    %v561 = vld [vmem:[#allocation8 + $0x8] sm:$0xff]
    %v562 = vld [vmem:[#allocation8 + $0x10] sm:$0xff]
    %v563 = vld [vmem:[#allocation8 + $0x18] sm:$0xff]
    %v564 = vld [vmem:[#allocation8 + $0x20] sm:$0xff]
    %v565 = vld [vmem:[#allocation8 + $0x28] sm:$0xff]
    %v566 = vld [vmem:[#allocation8 + $0x30] sm:$0xff]
    %v567 = vld [vmem:[#allocation8 + $0x38] sm:$0xff]
    %v568 = vld [vmem:[#allocation8 + $0x40] sm:$0xff]
    %v569 = vld [vmem:[#allocation8 + $0x48] sm:$0xff]
    %v570 = vld [vmem:[#allocation8 + $0x50] sm:$0xff]
    %v571 = vld [vmem:[#allocation8 + $0x58] sm:$0xff]
    %v572 = vld [vmem:[#allocation8 + $0x60] sm:$0xff]
    %v573 = vld [vmem:[#allocation8 + $0x68] sm:$0xff]
    %v574 = vld [vmem:[#allocation8 + $0x70] sm:$0xff]
    %v575 = vld [vmem:[#allocation8 + $0x78] sm:$0xff]
    %v584 = vunpack.c.l.b16 %v536
    %v585 = vunpack.c.l.b16 %v537
    %v586 = vunpack.c.l.b16 %v538
    %v587 = vunpack.c.l.b16 %v539
    %v588 = vunpack.c.l.b16 %v540
    %v589 = vunpack.c.l.b16 %v541
    %v590 = vunpack.c.l.b16 %v542
    %v591 = vunpack.c.l.b16 %v543
    %vm592 = vcmask 1041409
    %v593 = vsel %vm592, %v585, %v584
    %vm594 = vcmask 1042434
    %v595 = vsel %vm594, %v586, %v593
    %vm596 = vcmask 1043459
    %v597 = vsel %vm596, %v587, %v595
    %vm598 = vcmask 1044484
    %v599 = vsel %vm598, %v588, %v597
    %vm600 = vcmask 1045509
    %v601 = vsel %vm600, %v589, %v599
    %vm602 = vcmask 1046534
    %v603 = vsel %vm602, %v590, %v601
    %vm604 = vcmask 1047559
    %v605 = vsel %vm604, %v591, %v603
    %v606 = vpack.c.b16 %v605, %v605
    %v615 = vunpack.c.l.b16 %v568
    %v616 = vunpack.c.h.b16 %v568
    %v617 = vunpack.c.l.b16 %v569
    %v618 = vunpack.c.h.b16 %v569
    %v619 = vunpack.c.l.b16 %v570
    %v620 = vunpack.c.h.b16 %v570
    %v621 = vunpack.c.l.b16 %v571
    %v622 = vunpack.c.h.b16 %v571
    %v623 = vunpack.c.l.b16 %v572
    %v624 = vunpack.c.h.b16 %v572
    %v625 = vunpack.c.l.b16 %v573
    %v626 = vunpack.c.h.b16 %v573
    %v627 = vunpack.c.l.b16 %v574
    %v628 = vunpack.c.h.b16 %v574
    %v629 = vunpack.c.l.b16 %v575
    %v630 = vunpack.c.h.b16 %v575
    %v631 = vpack.c.b16 %v619, %v615
    %v632 = vpack.c.b16 %v620, %v616
    %v633 = vpack.c.b16 %v621, %v617
    %v634 = vpack.c.b16 %v622, %v618
    %v635 = vpack.c.b16 %v627, %v623
    %v636 = vpack.c.b16 %v628, %v624
    %v637 = vpack.c.b16 %v629, %v625
    %v638 = vpack.c.b16 %v630, %v626
    %v648 = vsel %vm391, %v606, 0
    %650 = vmatprep.subr.bf16.mxu0 %v632
    %651 = vmatpush1.bf16.msra.mxu0 %v631
    %652 = vmatprep.subr.bf16.mxu0 %v636
    %653 = vmatpush1.bf16.msra.mxu0 %v635
    %654 = vmatprep.subr.bf16.mxu0 0
    %655 = vmatpush1.bf16.msra.mxu0 0
    %656 = vmatprep.subr.bf16.mxu0 0
    %657 = vmatpush1.bf16.msra.mxu0 0
    %658 = vmatprep.subr.bf16.mxu0 0
    %659 = vmatpush1.bf16.msra.mxu0 0
    %660 = vmatprep.subr.bf16.mxu0 0
    %661 = vmatpush1.bf16.msra.mxu0 0
    %662 = vmatprep.subr.bf16.mxu0 0
    %663 = vmatpush1.bf16.msra.mxu0 0
    %664 = vmatprep.subr.bf16.mxu0 0
    %665 = vmatpush1.bf16.msra.mxu0 0
    %666 = vmatprep.subr.bf16.mxu0 0
    %667 = vmatpush1.bf16.msra.mxu0 0
    %668 = vmatprep.subr.bf16.mxu0 0
    %669 = vmatpush1.bf16.msra.mxu0 0
    %670 = vmatprep.subr.bf16.mxu0 0
    %671 = vmatpush1.bf16.msra.mxu0 0
    %672 = vmatprep.subr.bf16.mxu0 0
    %673 = vmatpush1.bf16.msra.mxu0 0
    %674 = vmatprep.subr.bf16.mxu0 0
    %675 = vmatpush1.bf16.msra.mxu0 0
    %676 = vmatprep.subr.bf16.mxu0 0
    %677 = vmatpush1.bf16.msra.mxu0 0
    %678 = vmatprep.subr.bf16.mxu0 0
    %679 = vmatpush1.bf16.msra.mxu0 0
    %680 = vmatprep.subr.bf16.mxu0 0
    %681 = vmatpush1.bf16.msra.mxu0 0
    %682 = vmatprep.mubr.bf16.mxu0 0
    %683 = vmatmul.mubr.bf16.gmra.mrb[0].mxu0 %v648
    %v684 = vpop.f32.mrb[0].mxu0
    %v685 = vadd.f32 0.0, %v684
    %v686 = vpop.f32.mrb[0].mxu0
    %v687 = vadd.f32 0.0, %v686
    %v688 = vpop.f32.mrb[0].mxu0
    %v689 = vpop.f32.mrb[0].mxu0
    %690 = vdwg.mxu0
    %691 = vmatprep.subr.bf16.mxu0 %v634
    %692 = vmatpush1.bf16.msra.mxu0 %v633
    %693 = vmatprep.subr.bf16.mxu0 %v638
    %694 = vmatpush1.bf16.msra.mxu0 %v637
    %695 = vmatprep.subr.bf16.mxu0 0
    %696 = vmatpush1.bf16.msra.mxu0 0
    %697 = vmatprep.subr.bf16.mxu0 0
    %698 = vmatpush1.bf16.msra.mxu0 0
    %699 = vmatprep.subr.bf16.mxu0 0
    %700 = vmatpush1.bf16.msra.mxu0 0
    %701 = vmatprep.subr.bf16.mxu0 0
    %702 = vmatpush1.bf16.msra.mxu0 0
    %703 = vmatprep.subr.bf16.mxu0 0
    %704 = vmatpush1.bf16.msra.mxu0 0
    %705 = vmatprep.subr.bf16.mxu0 0
    %706 = vmatpush1.bf16.msra.mxu0 0
    %707 = vmatprep.subr.bf16.mxu0 0
    %708 = vmatpush1.bf16.msra.mxu0 0
    %709 = vmatprep.subr.bf16.mxu0 0
    %710 = vmatpush1.bf16.msra.mxu0 0
    %711 = vmatprep.subr.bf16.mxu0 0
    %712 = vmatpush1.bf16.msra.mxu0 0
    %713 = vmatprep.subr.bf16.mxu0 0
    %714 = vmatpush1.bf16.msra.mxu0 0
    %715 = vmatprep.subr.bf16.mxu0 0
    %716 = vmatpush1.bf16.msra.mxu0 0
    %717 = vmatprep.subr.bf16.mxu0 0
    %718 = vmatpush1.bf16.msra.mxu0 0
    %719 = vmatprep.subr.bf16.mxu0 0
    %720 = vmatpush1.bf16.msra.mxu0 0
    %721 = vmatprep.subr.bf16.mxu0 0
    %722 = vmatpush1.bf16.msra.mxu0 0
    %723 = vmatprep.mubr.bf16.mxu0 0
    %724 = vmatmul.mubr.bf16.gmra.mrb[0].mxu0 %v648
    %v725 = vpop.f32.mrb[0].mxu0
    %v726 = vadd.f32 0.0, %v725
    %v727 = vpop.f32.mrb[0].mxu0
    %v728 = vadd.f32 0.0, %v727
    %v729 = vpop.f32.mrb[0].mxu0
    %v730 = vpop.f32.mrb[0].mxu0
    %731 = vdwg.mxu0
    %v740 = vunpack.c.l.b16 %v528
    %v741 = vunpack.c.l.b16 %v529
    %v742 = vunpack.c.l.b16 %v530
    %v743 = vunpack.c.l.b16 %v531
    %v744 = vunpack.c.l.b16 %v532
    %v745 = vunpack.c.l.b16 %v533
    %v746 = vunpack.c.l.b16 %v534
    %v747 = vunpack.c.l.b16 %v535
    %v748 = vsel %vm592, %v741, %v740
    %v749 = vsel %vm594, %v742, %v748
    %v750 = vsel %vm596, %v743, %v749
    %v751 = vsel %vm598, %v744, %v750
    %v752 = vsel %vm600, %v745, %v751
    %v753 = vsel %vm602, %v746, %v752
    %v754 = vsel %vm604, %v747, %v753
    %v755 = vpack.c.b16 %v754, %v754
    %v764 = vunpack.c.l.b16 %v560
    %v765 = vunpack.c.h.b16 %v560
    %v766 = vunpack.c.l.b16 %v561
    %v767 = vunpack.c.h.b16 %v561
    %v768 = vunpack.c.l.b16 %v562
    %v769 = vunpack.c.h.b16 %v562
    %v770 = vunpack.c.l.b16 %v563
    %v771 = vunpack.c.h.b16 %v563
    %v772 = vunpack.c.l.b16 %v564
    %v773 = vunpack.c.h.b16 %v564
    %v774 = vunpack.c.l.b16 %v565
    %v775 = vunpack.c.h.b16 %v565
    %v776 = vunpack.c.l.b16 %v566
    %v777 = vunpack.c.h.b16 %v566
    %v778 = vunpack.c.l.b16 %v567
    %v779 = vunpack.c.h.b16 %v567
    %v780 = vpack.c.b16 %v768, %v764
    %v781 = vpack.c.b16 %v769, %v765
    %v782 = vpack.c.b16 %v770, %v766
    %v783 = vpack.c.b16 %v771, %v767
    %v784 = vpack.c.b16 %v776, %v772
    %v785 = vpack.c.b16 %v777, %v773
    %v786 = vpack.c.b16 %v778, %v774
    %v787 = vpack.c.b16 %v779, %v775
    %v797 = vsel %vm391, %v755, 0
    %799 = vmatprep.subr.bf16.mxu0 %v781
    %800 = vmatpush1.bf16.msra.mxu0 %v780
    %801 = vmatprep.subr.bf16.mxu0 %v785
    %802 = vmatpush1.bf16.msra.mxu0 %v784
    %803 = vmatprep.subr.bf16.mxu0 0
    %804 = vmatpush1.bf16.msra.mxu0 0
    %805 = vmatprep.subr.bf16.mxu0 0
    %806 = vmatpush1.bf16.msra.mxu0 0
    %807 = vmatprep.subr.bf16.mxu0 0
    %808 = vmatpush1.bf16.msra.mxu0 0
    %809 = vmatprep.subr.bf16.mxu0 0
    %810 = vmatpush1.bf16.msra.mxu0 0
    %811 = vmatprep.subr.bf16.mxu0 0
    %812 = vmatpush1.bf16.msra.mxu0 0
    %813 = vmatprep.subr.bf16.mxu0 0
    %814 = vmatpush1.bf16.msra.mxu0 0
    %815 = vmatprep.subr.bf16.mxu0 0
    %816 = vmatpush1.bf16.msra.mxu0 0
    %817 = vmatprep.subr.bf16.mxu0 0
    %818 = vmatpush1.bf16.msra.mxu0 0
    %819 = vmatprep.subr.bf16.mxu0 0
    %820 = vmatpush1.bf16.msra.mxu0 0
    %821 = vmatprep.subr.bf16.mxu0 0
    %822 = vmatpush1.bf16.msra.mxu0 0
    %823 = vmatprep.subr.bf16.mxu0 0
    %824 = vmatpush1.bf16.msra.mxu0 0
    %825 = vmatprep.subr.bf16.mxu0 0
    %826 = vmatpush1.bf16.msra.mxu0 0
    %827 = vmatprep.subr.bf16.mxu0 0
    %828 = vmatpush1.bf16.msra.mxu0 0
    %829 = vmatprep.subr.bf16.mxu0 0
    %830 = vmatpush1.bf16.msra.mxu0 0
    %831 = vmatprep.mubr.bf16.mxu0 0
    %832 = vmatmul.mubr.bf16.gmra.mrb[0].mxu0 %v797
    %v833 = vpop.f32.mrb[0].mxu0
    %v834 = vadd.f32 %v685, %v833
    %v835 = vpop.f32.mrb[0].mxu0
    %v836 = vadd.f32 %v687, %v835
    %v837 = vpop.f32.mrb[0].mxu0
    %v838 = vpop.f32.mrb[0].mxu0
    %839 = vdwg.mxu0
    %840 = vmatprep.subr.bf16.mxu0 %v783
    %841 = vmatpush1.bf16.msra.mxu0 %v782
    %842 = vmatprep.subr.bf16.mxu0 %v787
    %843 = vmatpush1.bf16.msra.mxu0 %v786
    %844 = vmatprep.subr.bf16.mxu0 0
    %845 = vmatpush1.bf16.msra.mxu0 0
    %846 = vmatprep.subr.bf16.mxu0 0
    %847 = vmatpush1.bf16.msra.mxu0 0
    %848 = vmatprep.subr.bf16.mxu0 0
    %849 = vmatpush1.bf16.msra.mxu0 0
    %850 = vmatprep.subr.bf16.mxu0 0
    %851 = vmatpush1.bf16.msra.mxu0 0
    %852 = vmatprep.subr.bf16.mxu0 0
    %853 = vmatpush1.bf16.msra.mxu0 0
    %854 = vmatprep.subr.bf16.mxu0 0
    %855 = vmatpush1.bf16.msra.mxu0 0
    %856 = vmatprep.subr.bf16.mxu0 0
    %857 = vmatpush1.bf16.msra.mxu0 0
    %858 = vmatprep.subr.bf16.mxu0 0
    %859 = vmatpush1.bf16.msra.mxu0 0
    %860 = vmatprep.subr.bf16.mxu0 0
    %861 = vmatpush1.bf16.msra.mxu0 0
    %862 = vmatprep.subr.bf16.mxu0 0
    %863 = vmatpush1.bf16.msra.mxu0 0
    %864 = vmatprep.subr.bf16.mxu0 0
    %865 = vmatpush1.bf16.msra.mxu0 0
    %866 = vmatprep.subr.bf16.mxu0 0
    %867 = vmatpush1.bf16.msra.mxu0 0
    %868 = vmatprep.subr.bf16.mxu0 0
    %869 = vmatpush1.bf16.msra.mxu0 0
    %870 = vmatprep.subr.bf16.mxu0 0
    %871 = vmatpush1.bf16.msra.mxu0 0
    %872 = vmatprep.mubr.bf16.mxu0 0
    %873 = vmatmul.mubr.bf16.gmra.mrb[0].mxu0 %v797
    %v874 = vpop.f32.mrb[0].mxu0
    %v875 = vadd.f32 %v726, %v874
    %v876 = vpop.f32.mrb[0].mxu0
    %v877 = vadd.f32 %v728, %v876
    %v878 = vpop.f32.mrb[0].mxu0
    %v879 = vpop.f32.mrb[0].mxu0
    %880 = vdwg.mxu0
    %v881 = vld [vmem:[#allocation8 + $0x80] sm:$0xff]
    %v882 = vld [vmem:[#allocation8 + $0x88] sm:$0xff]
    %v883 = vld [vmem:[#allocation8 + $0x90] sm:$0xff]
    %v884 = vld [vmem:[#allocation8 + $0x98] sm:$0xff]
    %v885 = vld [vmem:[#allocation8 + $0xa0] sm:$0xff]
    %v886 = vld [vmem:[#allocation8 + $0xa8] sm:$0xff]
    %v887 = vld [vmem:[#allocation8 + $0xb0] sm:$0xff]
    %v888 = vld [vmem:[#allocation8 + $0xb8] sm:$0xff]
    %v897 = vunpack.c.l.b16 %v552
    %v898 = vunpack.c.l.b16 %v553
    %v899 = vunpack.c.l.b16 %v554
    %v900 = vunpack.c.l.b16 %v555
    %v901 = vunpack.c.l.b16 %v556
    %v902 = vunpack.c.l.b16 %v557
    %v903 = vunpack.c.l.b16 %v558
    %v904 = vunpack.c.l.b16 %v559
    %v905 = vsel %vm592, %v898, %v897
    %v906 = vsel %vm594, %v899, %v905
    %v907 = vsel %vm596, %v900, %v906
    %v908 = vsel %vm598, %v901, %v907
    %v909 = vsel %vm600, %v902, %v908
    %v910 = vsel %vm602, %v903, %v909
    %v911 = vsel %vm604, %v904, %v910
    %v912 = vpack.c.b16 %v911, %v911
    %v921 = vunpack.c.l.b16 %v881
    %v922 = vunpack.c.h.b16 %v881
    %v923 = vunpack.c.l.b16 %v882
    %v924 = vunpack.c.h.b16 %v882
    %v925 = vunpack.c.l.b16 %v883
    %v926 = vunpack.c.h.b16 %v883
    %v927 = vunpack.c.l.b16 %v884
    %v928 = vunpack.c.h.b16 %v884
    %v929 = vunpack.c.l.b16 %v885
    %v930 = vunpack.c.h.b16 %v885
    %v931 = vunpack.c.l.b16 %v886
    %v932 = vunpack.c.h.b16 %v886
    %v933 = vunpack.c.l.b16 %v887
    %v934 = vunpack.c.h.b16 %v887
    %v935 = vunpack.c.l.b16 %v888
    %v936 = vunpack.c.h.b16 %v888
    %v937 = vpack.c.b16 %v925, %v921
    %v938 = vpack.c.b16 %v926, %v922
    %v939 = vpack.c.b16 %v927, %v923
    %v940 = vpack.c.b16 %v928, %v924
    %v941 = vpack.c.b16 %v933, %v929
    %v942 = vpack.c.b16 %v934, %v930
    %v943 = vpack.c.b16 %v935, %v931
    %v944 = vpack.c.b16 %v936, %v932
    %v954 = vsel %vm391, %v912, 0
    %956 = vmatprep.subr.bf16.mxu0 %v938
    %957 = vmatpush1.bf16.msra.mxu0 %v937
    %958 = vmatprep.subr.bf16.mxu0 %v942
    %959 = vmatpush1.bf16.msra.mxu0 %v941
    %960 = vmatprep.subr.bf16.mxu0 0
    %961 = vmatpush1.bf16.msra.mxu0 0
    %962 = vmatprep.subr.bf16.mxu0 0
    %963 = vmatpush1.bf16.msra.mxu0 0
    %964 = vmatprep.subr.bf16.mxu0 0
    %965 = vmatpush1.bf16.msra.mxu0 0
    %966 = vmatprep.subr.bf16.mxu0 0
    %967 = vmatpush1.bf16.msra.mxu0 0
    %968 = vmatprep.subr.bf16.mxu0 0
    %969 = vmatpush1.bf16.msra.mxu0 0
    %970 = vmatprep.subr.bf16.mxu0 0
    %971 = vmatpush1.bf16.msra.mxu0 0
    %972 = vmatprep.subr.bf16.mxu0 0
    %973 = vmatpush1.bf16.msra.mxu0 0
    %974 = vmatprep.subr.bf16.mxu0 0
    %975 = vmatpush1.bf16.msra.mxu0 0
    %976 = vmatprep.subr.bf16.mxu0 0
    %977 = vmatpush1.bf16.msra.mxu0 0
    %978 = vmatprep.subr.bf16.mxu0 0
    %979 = vmatpush1.bf16.msra.mxu0 0
    %980 = vmatprep.subr.bf16.mxu0 0
    %981 = vmatpush1.bf16.msra.mxu0 0
    %982 = vmatprep.subr.bf16.mxu0 0
    %983 = vmatpush1.bf16.msra.mxu0 0
    %984 = vmatprep.subr.bf16.mxu0 0
    %985 = vmatpush1.bf16.msra.mxu0 0
    %986 = vmatprep.subr.bf16.mxu0 0
    %987 = vmatpush1.bf16.msra.mxu0 0
    %988 = vmatprep.mubr.bf16.mxu0 0
    %989 = vmatmul.mubr.bf16.gmra.mrb[0].mxu0 %v954
    %v990 = vpop.f32.mrb[0].mxu0
    %v991 = vadd.f32 0.0, %v990
    %v992 = vpop.f32.mrb[0].mxu0
    %v993 = vadd.f32 0.0, %v992
    %v994 = vpop.f32.mrb[0].mxu0
    %v995 = vpop.f32.mrb[0].mxu0
    %996 = vdwg.mxu0
    %997 = vmatprep.subr.bf16.mxu0 %v940
    %998 = vmatpush1.bf16.msra.mxu0 %v939
    %999 = vmatprep.subr.bf16.mxu0 %v944
    %1000 = vmatpush1.bf16.msra.mxu0 %v943
    %1001 = vmatprep.subr.bf16.mxu0 0
    %1002 = vmatpush1.bf16.msra.mxu0 0
    %1003 = vmatprep.subr.bf16.mxu0 0
    %1004 = vmatpush1.bf16.msra.mxu0 0
    %1005 = vmatprep.subr.bf16.mxu0 0
    %1006 = vmatpush1.bf16.msra.mxu0 0
    %1007 = vmatprep.subr.bf16.mxu0 0
    %1008 = vmatpush1.bf16.msra.mxu0 0
    %1009 = vmatprep.subr.bf16.mxu0 0
    %1010 = vmatpush1.bf16.msra.mxu0 0
    %1011 = vmatprep.subr.bf16.mxu0 0
    %1012 = vmatpush1.bf16.msra.mxu0 0
    %1013 = vmatprep.subr.bf16.mxu0 0
    %1014 = vmatpush1.bf16.msra.mxu0 0
    %1015 = vmatprep.subr.bf16.mxu0 0
    %1016 = vmatpush1.bf16.msra.mxu0 0
    %1017 = vmatprep.subr.bf16.mxu0 0
    %1018 = vmatpush1.bf16.msra.mxu0 0
    %1019 = vmatprep.subr.bf16.mxu0 0
    %1020 = vmatpush1.bf16.msra.mxu0 0
    %1021 = vmatprep.subr.bf16.mxu0 0
    %1022 = vmatpush1.bf16.msra.mxu0 0
    %1023 = vmatprep.subr.bf16.mxu0 0
    %1024 = vmatpush1.bf16.msra.mxu0 0
    %1025 = vmatprep.subr.bf16.mxu0 0
    %1026 = vmatpush1.bf16.msra.mxu0 0
    %1027 = vmatprep.subr.bf16.mxu0 0
    %1028 = vmatpush1.bf16.msra.mxu0 0
    %1029 = vmatprep.mubr.bf16.mxu0 0
    %1030 = vmatmul.mubr.bf16.gmra.mrb[0].mxu0 %v954
    %v1031 = vpop.f32.mrb[0].mxu0
    %v1032 = vadd.f32 0.0, %v1031
    %v1033 = vpop.f32.mrb[0].mxu0
    %v1034 = vadd.f32 0.0, %v1033
    %v1035 = vpop.f32.mrb[0].mxu0
    %v1036 = vpop.f32.mrb[0].mxu0
    %1037 = vdwg.mxu0
    %v1038 = vadd.f32 %v834, %v991
    %v1039 = vadd.f32 %v836, %v993
    %v1040 = vadd.f32 %v875, %v1032
    %v1041 = vadd.f32 %v877, %v1034
    %v1042 = vld [vmem:[%s5] sm:$0xf]
    %v1044 = vlaneseq
    %v1045 = vshrl.u32 %v1044, 7
    %v1046 = vsub.s32 0, %v1045
    %v1047 = vrot.slane %v1042, %v1046
    %v1048 = vlaneseq
    %v1049 = vshrl.u32 %v1048, 7
    %v1050 = vsub.s32 1, %v1049
    %v1051 = vrot.slane %v1042, %v1050
    %v1052 = vlaneseq
    %v1053 = vshrl.u32 %v1052, 7
    %v1054 = vsub.s32 2, %v1053
    %v1055 = vrot.slane %v1042, %v1054
    %v1056 = vlaneseq
    %v1057 = vshrl.u32 %v1056, 7
    %v1058 = vsub.s32 3, %v1057
    %v1059 = vrot.slane %v1042, %v1058
    %v1064 = vadd.f32 %v1038, %v1047
    %v1065 = vadd.f32 %v1039, %v1051
    %v1066 = vadd.f32 %v1040, %v1055
    %v1067 = vadd.f32 %v1041, %v1059
    %v1068 = vmax.f32 %v1064, 0.0
    %v1069 = vmax.f32 %v1065, 0.0
    %v1070 = vmax.f32 %v1066, 0.0
    %v1071 = vmax.f32 %v1067, 0.0
    %v1072 = vpack.c.bf16 %v1068, %v1068
    %v1073 = vpack.c.bf16 %v1069, %v1069
    %v1074 = vpack.c.bf16 %v1070, %v1070
    %v1075 = vpack.c.bf16 %v1071, %v1071
    %v1076 = vld [vmem:[#allocation10] sm:$0xff]
    %v1077 = vld [vmem:[#allocation10 + $0x8] sm:$0xff]
    %v1078 = vld [vmem:[#allocation10 + $0x10] sm:$0xff]
    %v1079 = vld [vmem:[#allocation10 + $0x18] sm:$0xff]
    %v1080 = vld [vmem:[#allocation10 + $0x20] sm:$0xff]
    %v1081 = vld [vmem:[#allocation10 + $0x28] sm:$0xff]
    %v1082 = vld [vmem:[#allocation10 + $0x30] sm:$0xff]
    %v1083 = vld [vmem:[#allocation10 + $0x38] sm:$0xff]
    %v1084 = vld [vmem:[#allocation10 + $0x40] sm:$0xff]
    %v1085 = vld [vmem:[#allocation10 + $0x48] sm:$0xff]
    %v1086 = vld [vmem:[#allocation10 + $0x50] sm:$0xff]
    %v1087 = vld [vmem:[#allocation10 + $0x58] sm:$0xff]
    %v1088 = vld [vmem:[#allocation10 + $0x60] sm:$0xff]
    %v1089 = vld [vmem:[#allocation10 + $0x68] sm:$0xff]
    %v1090 = vld [vmem:[#allocation10 + $0x70] sm:$0xff]
    %v1091 = vld [vmem:[#allocation10 + $0x78] sm:$0xff]
    %v1092 = vld [vmem:[#allocation10 + $0x80] sm:$0xff]
    %v1093 = vld [vmem:[#allocation10 + $0x88] sm:$0xff]
    %v1094 = vld [vmem:[#allocation10 + $0x90] sm:$0xff]
    %v1095 = vld [vmem:[#allocation10 + $0x98] sm:$0xff]
    %v1096 = vld [vmem:[#allocation10 + $0xa0] sm:$0xff]
    %v1097 = vld [vmem:[#allocation10 + $0xa8] sm:$0xff]
    %v1098 = vld [vmem:[#allocation10 + $0xb0] sm:$0xff]
    %v1099 = vld [vmem:[#allocation10 + $0xb8] sm:$0xff]
    %v1100 = vld [vmem:[#allocation10 + $0xc0] sm:$0xff]
    %v1101 = vld [vmem:[#allocation10 + $0xc8] sm:$0xff]
    %v1102 = vld [vmem:[#allocation10 + $0xd0] sm:$0xff]
    %v1103 = vld [vmem:[#allocation10 + $0xd8] sm:$0xff]
    %v1104 = vld [vmem:[#allocation10 + $0xe0] sm:$0xff]
    %v1105 = vld [vmem:[#allocation10 + $0xe8] sm:$0xff]
    %v1106 = vld [vmem:[#allocation10 + $0xf0] sm:$0xff]
    %v1107 = vld [vmem:[#allocation10 + $0xf8] sm:$0xff]
    %v1108 = vld [vmem:[#allocation10 + $0x100] sm:$0xff]
    %v1109 = vld [vmem:[#allocation10 + $0x108] sm:$0xff]
    %v1110 = vld [vmem:[#allocation10 + $0x110] sm:$0xff]
    %v1111 = vld [vmem:[#allocation10 + $0x118] sm:$0xff]
    %v1112 = vld [vmem:[#allocation10 + $0x120] sm:$0xff]
    %v1113 = vld [vmem:[#allocation10 + $0x128] sm:$0xff]
    %v1114 = vld [vmem:[#allocation10 + $0x130] sm:$0xff]
    %v1115 = vld [vmem:[#allocation10 + $0x138] sm:$0xff]
    %v1116 = vld [vmem:[#allocation10 + $0x140] sm:$0xff]
    %v1117 = vld [vmem:[#allocation10 + $0x148] sm:$0xff]
    %v1118 = vld [vmem:[#allocation10 + $0x150] sm:$0xff]
    %v1119 = vld [vmem:[#allocation10 + $0x158] sm:$0xff]
    %v1120 = vld [vmem:[#allocation10 + $0x160] sm:$0xff]
    %v1121 = vld [vmem:[#allocation10 + $0x168] sm:$0xff]
    %v1122 = vld [vmem:[#allocation10 + $0x170] sm:$0xff]
    %v1123 = vld [vmem:[#allocation10 + $0x178] sm:$0xff]
    %v1124 = vld [vmem:[#allocation10 + $0x180] sm:$0xff]
    %v1125 = vld [vmem:[#allocation10 + $0x188] sm:$0xff]
    %v1126 = vld [vmem:[#allocation10 + $0x190] sm:$0xff]
    %v1127 = vld [vmem:[#allocation10 + $0x198] sm:$0xff]
    %v1128 = vld [vmem:[#allocation10 + $0x1a0] sm:$0xff]
    %v1129 = vld [vmem:[#allocation10 + $0x1a8] sm:$0xff]
    %v1130 = vld [vmem:[#allocation10 + $0x1b0] sm:$0xff]
    %v1131 = vld [vmem:[#allocation10 + $0x1b8] sm:$0xff]
    %v1132 = vld [vmem:[#allocation10 + $0x1c0] sm:$0xff]
    %v1133 = vld [vmem:[#allocation10 + $0x1c8] sm:$0xff]
    %v1134 = vld [vmem:[#allocation10 + $0x1d0] sm:$0xff]
    %v1135 = vld [vmem:[#allocation10 + $0x1d8] sm:$0xff]
    %v1136 = vld [vmem:[#allocation10 + $0x1e0] sm:$0xff]
    %v1137 = vld [vmem:[#allocation10 + $0x1e8] sm:$0xff]
    %v1138 = vld [vmem:[#allocation10 + $0x1f0] sm:$0xff]
    %v1139 = vld [vmem:[#allocation10 + $0x1f8] sm:$0xff]
    %v1140 = vld [vmem:[%s7] sm:$0x3]
    %v1142 = vlaneseq
    %v1143 = vshrl.u32 %v1142, 7
    %v1144 = vsub.s32 0, %v1143
    %v1145 = vrot.slane %v1140, %v1144
    %v1146 = vlaneseq
    %v1147 = vshrl.u32 %v1146, 7
    %v1148 = vsub.s32 1, %v1147
    %v1149 = vrot.slane %v1140, %v1148
    %v1216 = vunpack.c.l.b16 %v1076
    %v1217 = vunpack.c.h.b16 %v1076
    %v1218 = vunpack.c.l.b16 %v1077
    %v1219 = vunpack.c.h.b16 %v1077
    %v1220 = vunpack.c.l.b16 %v1078
    %v1221 = vunpack.c.h.b16 %v1078
    %v1222 = vunpack.c.l.b16 %v1079
    %v1223 = vunpack.c.h.b16 %v1079
    %v1224 = vunpack.c.l.b16 %v1080
    %v1225 = vunpack.c.h.b16 %v1080
    %v1226 = vunpack.c.l.b16 %v1081
    %v1227 = vunpack.c.h.b16 %v1081
    %v1228 = vunpack.c.l.b16 %v1082
    %v1229 = vunpack.c.h.b16 %v1082
    %v1230 = vunpack.c.l.b16 %v1083
    %v1231 = vunpack.c.h.b16 %v1083
    %v1232 = vunpack.c.l.b16 %v1084
    %v1233 = vunpack.c.h.b16 %v1084
    %v1234 = vunpack.c.l.b16 %v1085
    %v1235 = vunpack.c.h.b16 %v1085
    %v1236 = vunpack.c.l.b16 %v1086
    %v1237 = vunpack.c.h.b16 %v1086
    %v1238 = vunpack.c.l.b16 %v1087
    %v1239 = vunpack.c.h.b16 %v1087
    %v1240 = vunpack.c.l.b16 %v1088
    %v1241 = vunpack.c.h.b16 %v1088
    %v1242 = vunpack.c.l.b16 %v1089
    %v1243 = vunpack.c.h.b16 %v1089
    %v1244 = vunpack.c.l.b16 %v1090
    %v1245 = vunpack.c.h.b16 %v1090
    %v1246 = vunpack.c.l.b16 %v1091
    %v1247 = vunpack.c.h.b16 %v1091
    %v1248 = vunpack.c.l.b16 %v1092
    %v1249 = vunpack.c.h.b16 %v1092
    %v1250 = vunpack.c.l.b16 %v1093
    %v1251 = vunpack.c.h.b16 %v1093
    %v1252 = vunpack.c.l.b16 %v1094
    %v1253 = vunpack.c.h.b16 %v1094
    %v1254 = vunpack.c.l.b16 %v1095
    %v1255 = vunpack.c.h.b16 %v1095
    %v1256 = vunpack.c.l.b16 %v1096
    %v1257 = vunpack.c.h.b16 %v1096
    %v1258 = vunpack.c.l.b16 %v1097
    %v1259 = vunpack.c.h.b16 %v1097
    %v1260 = vunpack.c.l.b16 %v1098
    %v1261 = vunpack.c.h.b16 %v1098
    %v1262 = vunpack.c.l.b16 %v1099
    %v1263 = vunpack.c.h.b16 %v1099
    %v1264 = vunpack.c.l.b16 %v1100
    %v1265 = vunpack.c.h.b16 %v1100
    %v1266 = vunpack.c.l.b16 %v1101
    %v1267 = vunpack.c.h.b16 %v1101
    %v1268 = vunpack.c.l.b16 %v1102
    %v1269 = vunpack.c.h.b16 %v1102
    %v1270 = vunpack.c.l.b16 %v1103
    %v1271 = vunpack.c.h.b16 %v1103
    %v1272 = vunpack.c.l.b16 %v1104
    %v1273 = vunpack.c.h.b16 %v1104
    %v1274 = vunpack.c.l.b16 %v1105
    %v1275 = vunpack.c.h.b16 %v1105
    %v1276 = vunpack.c.l.b16 %v1106
    %v1277 = vunpack.c.h.b16 %v1106
    %v1278 = vunpack.c.l.b16 %v1107
    %v1279 = vunpack.c.h.b16 %v1107
    %v1280 = vunpack.c.l.b16 %v1108
    %v1281 = vunpack.c.h.b16 %v1108
    %v1282 = vunpack.c.l.b16 %v1109
    %v1283 = vunpack.c.h.b16 %v1109
    %v1284 = vunpack.c.l.b16 %v1110
    %v1285 = vunpack.c.h.b16 %v1110
    %v1286 = vunpack.c.l.b16 %v1111
    %v1287 = vunpack.c.h.b16 %v1111
    %v1288 = vunpack.c.l.b16 %v1112
    %v1289 = vunpack.c.h.b16 %v1112
    %v1290 = vunpack.c.l.b16 %v1113
    %v1291 = vunpack.c.h.b16 %v1113
    %v1292 = vunpack.c.l.b16 %v1114
    %v1293 = vunpack.c.h.b16 %v1114
    %v1294 = vunpack.c.l.b16 %v1115
    %v1295 = vunpack.c.h.b16 %v1115
    %v1296 = vunpack.c.l.b16 %v1116
    %v1297 = vunpack.c.h.b16 %v1116
    %v1298 = vunpack.c.l.b16 %v1117
    %v1299 = vunpack.c.h.b16 %v1117
    %v1300 = vunpack.c.l.b16 %v1118
    %v1301 = vunpack.c.h.b16 %v1118
    %v1302 = vunpack.c.l.b16 %v1119
    %v1303 = vunpack.c.h.b16 %v1119
    %v1304 = vunpack.c.l.b16 %v1120
    %v1305 = vunpack.c.h.b16 %v1120
    %v1306 = vunpack.c.l.b16 %v1121
    %v1307 = vunpack.c.h.b16 %v1121
    %v1308 = vunpack.c.l.b16 %v1122
    %v1309 = vunpack.c.h.b16 %v1122
    %v1310 = vunpack.c.l.b16 %v1123
    %v1311 = vunpack.c.h.b16 %v1123
    %v1312 = vunpack.c.l.b16 %v1124
    %v1313 = vunpack.c.h.b16 %v1124
    %v1314 = vunpack.c.l.b16 %v1125
    %v1315 = vunpack.c.h.b16 %v1125
    %v1316 = vunpack.c.l.b16 %v1126
    %v1317 = vunpack.c.h.b16 %v1126
    %v1318 = vunpack.c.l.b16 %v1127
    %v1319 = vunpack.c.h.b16 %v1127
    %v1320 = vunpack.c.l.b16 %v1128
    %v1321 = vunpack.c.h.b16 %v1128
    %v1322 = vunpack.c.l.b16 %v1129
    %v1323 = vunpack.c.h.b16 %v1129
    %v1324 = vunpack.c.l.b16 %v1130
    %v1325 = vunpack.c.h.b16 %v1130
    %v1326 = vunpack.c.l.b16 %v1131
    %v1327 = vunpack.c.h.b16 %v1131
    %v1328 = vunpack.c.l.b16 %v1132
    %v1329 = vunpack.c.h.b16 %v1132
    %v1330 = vunpack.c.l.b16 %v1133
    %v1331 = vunpack.c.h.b16 %v1133
    %v1332 = vunpack.c.l.b16 %v1134
    %v1333 = vunpack.c.h.b16 %v1134
    %v1334 = vunpack.c.l.b16 %v1135
    %v1335 = vunpack.c.h.b16 %v1135
    %v1336 = vunpack.c.l.b16 %v1136
    %v1337 = vunpack.c.h.b16 %v1136
    %v1338 = vunpack.c.l.b16 %v1137
    %v1339 = vunpack.c.h.b16 %v1137
    %v1340 = vunpack.c.l.b16 %v1138
    %v1341 = vunpack.c.h.b16 %v1138
    %v1342 = vunpack.c.l.b16 %v1139
    %v1343 = vunpack.c.h.b16 %v1139
    %v1344 = vpack.c.b16 %v1218, %v1216
    %v1345 = vpack.c.b16 %v1219, %v1217
    %v1346 = vpack.c.b16 %v1222, %v1220
    %v1347 = vpack.c.b16 %v1223, %v1221
    %v1348 = vpack.c.b16 %v1226, %v1224
    %v1349 = vpack.c.b16 %v1227, %v1225
    %v1350 = vpack.c.b16 %v1230, %v1228
    %v1351 = vpack.c.b16 %v1231, %v1229
    %v1352 = vpack.c.b16 %v1234, %v1232
    %v1353 = vpack.c.b16 %v1235, %v1233
    %v1354 = vpack.c.b16 %v1238, %v1236
    %v1355 = vpack.c.b16 %v1239, %v1237
    %v1356 = vpack.c.b16 %v1242, %v1240
    %v1357 = vpack.c.b16 %v1243, %v1241
    %v1358 = vpack.c.b16 %v1246, %v1244
    %v1359 = vpack.c.b16 %v1247, %v1245
    %v1360 = vpack.c.b16 %v1250, %v1248
    %v1361 = vpack.c.b16 %v1251, %v1249
    %v1362 = vpack.c.b16 %v1254, %v1252
    %v1363 = vpack.c.b16 %v1255, %v1253
    %v1364 = vpack.c.b16 %v1258, %v1256
    %v1365 = vpack.c.b16 %v1259, %v1257
    %v1366 = vpack.c.b16 %v1262, %v1260
    %v1367 = vpack.c.b16 %v1263, %v1261
    %v1368 = vpack.c.b16 %v1266, %v1264
    %v1369 = vpack.c.b16 %v1267, %v1265
    %v1370 = vpack.c.b16 %v1270, %v1268
    %v1371 = vpack.c.b16 %v1271, %v1269
    %v1372 = vpack.c.b16 %v1274, %v1272
    %v1373 = vpack.c.b16 %v1275, %v1273
    %v1374 = vpack.c.b16 %v1278, %v1276
    %v1375 = vpack.c.b16 %v1279, %v1277
    %v1376 = vpack.c.b16 %v1282, %v1280
    %v1377 = vpack.c.b16 %v1283, %v1281
    %v1378 = vpack.c.b16 %v1286, %v1284
    %v1379 = vpack.c.b16 %v1287, %v1285
    %v1380 = vpack.c.b16 %v1290, %v1288
    %v1381 = vpack.c.b16 %v1291, %v1289
    %v1382 = vpack.c.b16 %v1294, %v1292
    %v1383 = vpack.c.b16 %v1295, %v1293
    %v1384 = vpack.c.b16 %v1298, %v1296
    %v1385 = vpack.c.b16 %v1299, %v1297
    %v1386 = vpack.c.b16 %v1302, %v1300
    %v1387 = vpack.c.b16 %v1303, %v1301
    %v1388 = vpack.c.b16 %v1306, %v1304
    %v1389 = vpack.c.b16 %v1307, %v1305
    %v1390 = vpack.c.b16 %v1310, %v1308
    %v1391 = vpack.c.b16 %v1311, %v1309
    %v1392 = vpack.c.b16 %v1314, %v1312
    %v1393 = vpack.c.b16 %v1315, %v1313
    %v1394 = vpack.c.b16 %v1318, %v1316
    %v1395 = vpack.c.b16 %v1319, %v1317
    %v1396 = vpack.c.b16 %v1322, %v1320
    %v1397 = vpack.c.b16 %v1323, %v1321
    %v1398 = vpack.c.b16 %v1326, %v1324
    %v1399 = vpack.c.b16 %v1327, %v1325
    %v1400 = vpack.c.b16 %v1330, %v1328
    %v1401 = vpack.c.b16 %v1331, %v1329
    %v1402 = vpack.c.b16 %v1334, %v1332
    %v1403 = vpack.c.b16 %v1335, %v1333
    %v1404 = vpack.c.b16 %v1338, %v1336
    %v1405 = vpack.c.b16 %v1339, %v1337
    %v1406 = vpack.c.b16 %v1342, %v1340
    %v1407 = vpack.c.b16 %v1343, %v1341
    %1472 = vmatprep.subr.bf16.mxu0 %v1345
    %1473 = vmatpush1.bf16.msra.mxu0 %v1344
    %1474 = vmatprep.subr.bf16.mxu0 %v1347
    %1475 = vmatpush1.bf16.msra.mxu0 %v1346
    %1476 = vmatprep.subr.bf16.mxu0 %v1349
    %1477 = vmatpush1.bf16.msra.mxu0 %v1348
    %1478 = vmatprep.subr.bf16.mxu0 %v1351
    %1479 = vmatpush1.bf16.msra.mxu0 %v1350
    %1480 = vmatprep.subr.bf16.mxu0 %v1353
    %1481 = vmatpush1.bf16.msra.mxu0 %v1352
    %1482 = vmatprep.subr.bf16.mxu0 %v1355
    %1483 = vmatpush1.bf16.msra.mxu0 %v1354
    %1484 = vmatprep.subr.bf16.mxu0 %v1357
    %1485 = vmatpush1.bf16.msra.mxu0 %v1356
    %1486 = vmatprep.subr.bf16.mxu0 %v1359
    %1487 = vmatpush1.bf16.msra.mxu0 %v1358
    %1488 = vmatprep.subr.bf16.mxu0 %v1361
    %1489 = vmatpush1.bf16.msra.mxu0 %v1360
    %1490 = vmatprep.subr.bf16.mxu0 %v1363
    %1491 = vmatpush1.bf16.msra.mxu0 %v1362
    %1492 = vmatprep.subr.bf16.mxu0 %v1365
    %1493 = vmatpush1.bf16.msra.mxu0 %v1364
    %1494 = vmatprep.subr.bf16.mxu0 %v1367
    %1495 = vmatpush1.bf16.msra.mxu0 %v1366
    %1496 = vmatprep.subr.bf16.mxu0 %v1369
    %1497 = vmatpush1.bf16.msra.mxu0 %v1368
    %1498 = vmatprep.subr.bf16.mxu0 %v1371
    %1499 = vmatpush1.bf16.msra.mxu0 %v1370
    %1500 = vmatprep.subr.bf16.mxu0 %v1373
    %1501 = vmatpush1.bf16.msra.mxu0 %v1372
    %1502 = vmatprep.subr.bf16.mxu0 %v1375
    %1503 = vmatpush1.bf16.msra.mxu0 %v1374
    %1504 = vmatprep.mubr.bf16.mxu0 %v1073
    %1505 = vmatmul.mubr.bf16.gmra.mrb[0].mxu0 %v1072
    %v1506 = vpop.f32.mrb[0].mxu0
    %v1507 = vadd.f32 %v1145, %v1506
    %v1508 = vpop.f32.mrb[0].mxu0
    %v1509 = vadd.f32 %v1149, %v1508
    %v1510 = vpop.f32.mrb[0].mxu0
    %v1511 = vpop.f32.mrb[0].mxu0
    %1512 = vdwg.mxu0
    %1513 = vmatprep.subr.bf16.mxu0 %v1377
    %1514 = vmatpush1.bf16.msra.mxu0 %v1376
    %1515 = vmatprep.subr.bf16.mxu0 %v1379
    %1516 = vmatpush1.bf16.msra.mxu0 %v1378
    %1517 = vmatprep.subr.bf16.mxu0 %v1381
    %1518 = vmatpush1.bf16.msra.mxu0 %v1380
    %1519 = vmatprep.subr.bf16.mxu0 %v1383
    %1520 = vmatpush1.bf16.msra.mxu0 %v1382
    %1521 = vmatprep.subr.bf16.mxu0 %v1385
    %1522 = vmatpush1.bf16.msra.mxu0 %v1384
    %1523 = vmatprep.subr.bf16.mxu0 %v1387
    %1524 = vmatpush1.bf16.msra.mxu0 %v1386
    %1525 = vmatprep.subr.bf16.mxu0 %v1389
    %1526 = vmatpush1.bf16.msra.mxu0 %v1388
    %1527 = vmatprep.subr.bf16.mxu0 %v1391
    %1528 = vmatpush1.bf16.msra.mxu0 %v1390
    %1529 = vmatprep.subr.bf16.mxu0 %v1393
    %1530 = vmatpush1.bf16.msra.mxu0 %v1392
    %1531 = vmatprep.subr.bf16.mxu0 %v1395
    %1532 = vmatpush1.bf16.msra.mxu0 %v1394
    %1533 = vmatprep.subr.bf16.mxu0 %v1397
    %1534 = vmatpush1.bf16.msra.mxu0 %v1396
    %1535 = vmatprep.subr.bf16.mxu0 %v1399
    %1536 = vmatpush1.bf16.msra.mxu0 %v1398
    %1537 = vmatprep.subr.bf16.mxu0 %v1401
    %1538 = vmatpush1.bf16.msra.mxu0 %v1400
    %1539 = vmatprep.subr.bf16.mxu0 %v1403
    %1540 = vmatpush1.bf16.msra.mxu0 %v1402
    %1541 = vmatprep.subr.bf16.mxu0 %v1405
    %1542 = vmatpush1.bf16.msra.mxu0 %v1404
    %1543 = vmatprep.subr.bf16.mxu0 %v1407
    %1544 = vmatpush1.bf16.msra.mxu0 %v1406
    %1545 = vmatprep.mubr.bf16.mxu0 %v1075
    %1546 = vmatmul.mubr.bf16.gmra.mrb[0].mxu0 %v1074
    %v1547 = vpop.f32.mrb[0].mxu0
    %v1548 = vadd.f32 %v1507, %v1547
    %v1549 = vpop.f32.mrb[0].mxu0
    %v1550 = vadd.f32 %v1509, %v1549
    %v1551 = vpop.f32.mrb[0].mxu0
    %v1552 = vpop.f32.mrb[0].mxu0
    %1553 = vdwg.mxu0
    %v1554 = vmax.f32 %v1548, 0.0
    %v1555 = vmax.f32 %v1550, 0.0
    %v1556 = vpack.c.bf16 %v1554, %v1554
    %v1557 = vpack.c.bf16 %v1555, %v1555
    %v1558 = vld [vmem:[#allocation11] sm:$0xf]
    %v1559 = vld [vmem:[#allocation11 + $0x4] sm:$0xf]
    %v1560 = vld [vmem:[#allocation11 + $0x8] sm:$0xf]
    %v1561 = vld [vmem:[#allocation11 + $0xc] sm:$0xf]
    %v1562 = vld [vmem:[#allocation11 + $0x10] sm:$0xf]
    %v1563 = vld [vmem:[#allocation11 + $0x14] sm:$0xf]
    %v1564 = vld [vmem:[#allocation11 + $0x18] sm:$0xf]
    %v1565 = vld [vmem:[#allocation11 + $0x1c] sm:$0xf]
    %v1566 = vld [vmem:[#allocation11 + $0x20] sm:$0xf]
    %v1567 = vld [vmem:[#allocation11 + $0x24] sm:$0xf]
    %v1568 = vld [vmem:[#allocation11 + $0x28] sm:$0xf]
    %v1569 = vld [vmem:[#allocation11 + $0x2c] sm:$0xf]
    %v1570 = vld [vmem:[#allocation11 + $0x30] sm:$0xf]
    %v1571 = vld [vmem:[#allocation11 + $0x34] sm:$0xf]
    %v1572 = vld [vmem:[#allocation11 + $0x38] sm:$0xf]
    %v1573 = vld [vmem:[#allocation11 + $0x3c] sm:$0xf]
    %v1574 = vld [vmem:[#allocation11 + $0x40] sm:$0xf]
    %v1575 = vld [vmem:[#allocation11 + $0x44] sm:$0xf]
    %v1576 = vld [vmem:[#allocation11 + $0x48] sm:$0xf]
    %v1577 = vld [vmem:[#allocation11 + $0x4c] sm:$0xf]
    %v1578 = vld [vmem:[#allocation11 + $0x50] sm:$0xf]
    %v1579 = vld [vmem:[#allocation11 + $0x54] sm:$0xf]
    %v1580 = vld [vmem:[#allocation11 + $0x58] sm:$0xf]
    %v1581 = vld [vmem:[#allocation11 + $0x5c] sm:$0xf]
    %v1582 = vld [vmem:[#allocation11 + $0x60] sm:$0xf]
    %v1583 = vld [vmem:[#allocation11 + $0x64] sm:$0xf]
    %v1584 = vld [vmem:[#allocation11 + $0x68] sm:$0xf]
    %v1585 = vld [vmem:[#allocation11 + $0x6c] sm:$0xf]
    %v1586 = vld [vmem:[#allocation11 + $0x70] sm:$0xf]
    %v1587 = vld [vmem:[#allocation11 + $0x74] sm:$0xf]
    %v1588 = vld [vmem:[#allocation11 + $0x78] sm:$0xf]
    %v1589 = vld [vmem:[#allocation11 + $0x7c] sm:$0xf]
    %v1590 = vld [vmem:[%s9] sm:$0x1]
    %v1592 = vlaneseq
    %v1593 = vshrl.u32 %v1592, 7
    %v1594 = vsub.s32 0, %v1593
    %v1595 = vrot.slane %v1590, %v1594
    %v1629 = vunpack.c.l.b16 %v1558
    %v1630 = vunpack.c.l.b16 %v1559
    %v1631 = vunpack.c.l.b16 %v1560
    %v1632 = vunpack.c.l.b16 %v1561
    %v1633 = vunpack.c.l.b16 %v1562
    %v1634 = vunpack.c.l.b16 %v1563
    %v1635 = vunpack.c.l.b16 %v1564
    %v1636 = vunpack.c.l.b16 %v1565
    %v1637 = vunpack.c.l.b16 %v1566
    %v1638 = vunpack.c.l.b16 %v1567
    %v1639 = vunpack.c.l.b16 %v1568
    %v1640 = vunpack.c.l.b16 %v1569
    %v1641 = vunpack.c.l.b16 %v1570
    %v1642 = vunpack.c.l.b16 %v1571
    %v1643 = vunpack.c.l.b16 %v1572
    %v1644 = vunpack.c.l.b16 %v1573
    %v1645 = vunpack.c.l.b16 %v1574
    %v1646 = vunpack.c.l.b16 %v1575
    %v1647 = vunpack.c.l.b16 %v1576
    %v1648 = vunpack.c.l.b16 %v1577
    %v1649 = vunpack.c.l.b16 %v1578
    %v1650 = vunpack.c.l.b16 %v1579
    %v1651 = vunpack.c.l.b16 %v1580
    %v1652 = vunpack.c.l.b16 %v1581
    %v1653 = vunpack.c.l.b16 %v1582
    %v1654 = vunpack.c.l.b16 %v1583
    %v1655 = vunpack.c.l.b16 %v1584
    %v1656 = vunpack.c.l.b16 %v1585
    %v1657 = vunpack.c.l.b16 %v1586
    %v1658 = vunpack.c.l.b16 %v1587
    %v1659 = vunpack.c.l.b16 %v1588
    %v1660 = vunpack.c.l.b16 %v1589
    %v1661 = vpack.c.b16 %v1630, %v1629
    %v1662 = vpack.c.b16 %v1632, %v1631
    %v1663 = vpack.c.b16 %v1634, %v1633
    %v1664 = vpack.c.b16 %v1636, %v1635
    %v1665 = vpack.c.b16 %v1638, %v1637
    %v1666 = vpack.c.b16 %v1640, %v1639
    %v1667 = vpack.c.b16 %v1642, %v1641
    %v1668 = vpack.c.b16 %v1644, %v1643
    %v1669 = vpack.c.b16 %v1646, %v1645
    %v1670 = vpack.c.b16 %v1648, %v1647
    %v1671 = vpack.c.b16 %v1650, %v1649
    %v1672 = vpack.c.b16 %v1652, %v1651
    %v1673 = vpack.c.b16 %v1654, %v1653
    %v1674 = vpack.c.b16 %v1656, %v1655
    %v1675 = vpack.c.b16 %v1658, %v1657
    %v1676 = vpack.c.b16 %v1660, %v1659
    %1693 = vmatprep.subr.bf16.mxu0 0
    %1694 = vmatpush1.bf16.msra.mxu0 %v1661
    %1695 = vmatprep.subr.bf16.mxu0 0
    %1696 = vmatpush1.bf16.msra.mxu0 %v1662
    %1697 = vmatprep.subr.bf16.mxu0 0
    %1698 = vmatpush1.bf16.msra.mxu0 %v1663
    %1699 = vmatprep.subr.bf16.mxu0 0
    %1700 = vmatpush1.bf16.msra.mxu0 %v1664
    %1701 = vmatprep.subr.bf16.mxu0 0
    %1702 = vmatpush1.bf16.msra.mxu0 %v1665
    %1703 = vmatprep.subr.bf16.mxu0 0
    %1704 = vmatpush1.bf16.msra.mxu0 %v1666
    %1705 = vmatprep.subr.bf16.mxu0 0
    %1706 = vmatpush1.bf16.msra.mxu0 %v1667
    %1707 = vmatprep.subr.bf16.mxu0 0
    %1708 = vmatpush1.bf16.msra.mxu0 %v1668
    %1709 = vmatprep.subr.bf16.mxu0 0
    %1710 = vmatpush1.bf16.msra.mxu0 %v1669
    %1711 = vmatprep.subr.bf16.mxu0 0
    %1712 = vmatpush1.bf16.msra.mxu0 %v1670
    %1713 = vmatprep.subr.bf16.mxu0 0
    %1714 = vmatpush1.bf16.msra.mxu0 %v1671
    %1715 = vmatprep.subr.bf16.mxu0 0
    %1716 = vmatpush1.bf16.msra.mxu0 %v1672
    %1717 = vmatprep.subr.bf16.mxu0 0
    %1718 = vmatpush1.bf16.msra.mxu0 %v1673
    %1719 = vmatprep.subr.bf16.mxu0 0
    %1720 = vmatpush1.bf16.msra.mxu0 %v1674
    %1721 = vmatprep.subr.bf16.mxu0 0
    %1722 = vmatpush1.bf16.msra.mxu0 %v1675
    %1723 = vmatprep.subr.bf16.mxu0 0
    %1724 = vmatpush1.bf16.msra.mxu0 %v1676
    %1725 = vmatprep.mubr.bf16.mxu0 %v1557
    %1726 = vmatmul.mubr.bf16.gmra.mrb[0].mxu0 %v1556
    %v1727 = vpop.f32.mrb[0].mxu0
    %v1728 = vadd.f32 %v1595, %v1727
    %v1729 = vpop.f32.mrb[0].mxu0
    %v1730 = vpop.f32.mrb[0].mxu0
    %v1731 = vpop.f32.mrb[0].mxu0
    %1732 = vdwg.mxu0
    %v1733 = vsub.f32 0.0, %v1728
    %v1734 = vmul.f32 %v1733, 1.442695
    %v1735 = vpow.pop %v1734
    %v1736 = vadd.f32 %v1735, 1.0
    %v1737 = vrcp.pop %v1736
    %1738 = vst [vmem:[#allocation13] sm:$0xff] %v1737
    // Predicated region
    $region66: #{tpu_custom_call.1} parent=1 // pred_check
      _
    $region67: #{tpu_custom_call.1} parent=1 // pred_check_branch
      %1740 = sbr.rel (0) target = $region69
    $region68: #{tpu_custom_call.1} parent=1 // pred_region
      %s1742 = ssub.s32 128, 128
      %1743 = vsyncadd [#allocation4], %s1742
      %s1745 = sshll.u32 [#allocation13], 4
      %s1746 = int_to_ptr.vmem [resolvable:$true] %s1745
      %1748 = dma.vmem_to_hbm [thread:$0]  %s1746, 128, %s10, [#allocation4]
    $region69: #{tpu_custom_call.1} parent=1 // pred_fallthru
      _
    // Predicated region
    $region70: #{tpu_custom_call.1} parent=1 // pred_check
      _
    $region71: #{tpu_custom_call.1} parent=1 // pred_check_branch
      %1750 = sbr.rel (0) target = $region73
    $region72: #{tpu_custom_call.1} parent=1 // pred_region
      %1751 = dma.done [#allocation4], 128
    $region73: #{tpu_custom_call.1} parent=1 // pred_fallthru
      _
    %1752 = vsyncpa [#allocation3], 1
    %1753 = vsyncpa [#allocation6], 1
    %1754 = vsyncpa [#allocation9], 1
    %1755 = vsyncpa [#allocation12], 1
    %1756 = vsyncpa [#allocation4], 1

</llo_original>
